<compile_context>
chip_gen: v5e
topology: v5e:2x2
jax: 0.10.0
libtpu: 0.0.40
codegen_flags: <defaults>
</compile_context>

<pallas_src>
import functools
import math

import numpy as np
import jax
import jax.numpy as jnp
from jax.experimental import pallas as pl
from jax.experimental.pallas import tpu as pltpu

# ----------------------------- config -----------------------------
VOCAB_SIZE   = 64
HIDDEN       = 32
NUM_LAYERS   = 2
NUM_HEADS    = 4
HEAD_DIM     = HIDDEN // NUM_HEADS
INTERMEDIATE = 64
MAX_POS      = 16
NUM_CLASSES  = 3
CLASS_PAD    = 128            # lane-dense padded classifier width
SLAB_W       = 128            # parameter-slab lane width
SEQ          = 8
BATCH        = 2
LN_EPS       = 1e-12


# ----------------------------- slab layout -----------------------------
def _build_layout(batch, seq):
    """Row layout of the single packed parameter slab (width SLAB_W=128).
    Returns ({name: (row_offset, n_rows, read_cols)}, total_rows).
    Every entry is sublane-aligned (offset multiple of 8)."""
    layout = {}
    row = [0]

    def add(name, nrows, ncols):
        layout[name] = (row[0], nrows, ncols)
        row[0] += ((nrows + 7) // 8) * 8

    add("word_emb", VOCAB_SIZE, HIDDEN)
    add("pos_tok", batch * seq, HIDDEN)          # precomputed pos+token-type emb
    add("emb_ln_g", 1, HIDDEN)
    add("emb_ln_b", 1, HIDDEN)
    for l in range(NUM_LAYERS):
        p = f"l{l}_"
        add(p + "wqkv", HIDDEN, SLAB_W)          # (H, 3H) padded to 128 lanes
        add(p + "bqkv", 1, SLAB_W)
        add(p + "wo", HIDDEN, HIDDEN)
        add(p + "bo", 1, HIDDEN)
        add(p + "ln1_g", 1, HIDDEN)
        add(p + "ln1_b", 1, HIDDEN)
        add(p + "wi", HIDDEN, INTERMEDIATE)
        add(p + "bi", 1, INTERMEDIATE)
        add(p + "wo2", INTERMEDIATE, HIDDEN)
        add(p + "bo2", 1, HIDDEN)
        add(p + "ln2_g", 1, HIDDEN)
        add(p + "ln2_b", 1, HIDDEN)
    add("pool_w", HIDDEN, HIDDEN)
    add("pool_b", 1, HIDDEN)
    add("fc_w", HIDDEN, CLASS_PAD)               # zero-padded to 128 classes
    add("fc_b", 1, CLASS_PAD)
    add("sel", batch, batch * seq)               # CLS row-selection matrix
    return layout, row[0]


# ----------------------------- fused kernel -----------------------------
def _bert_kernel(slab_ref, ids_ref, mask_ref, out_ref, *, batch, seq, layout):
    """Inputs:
         slab (R, 128) f32   packed parameters (one DMA)
         ids  (B*S, 1) int32 token ids
         mask (B, S)   int32 attention mask
       Output: logits_padded (B, CLASS_PAD) f32
    """
    f32 = jnp.float32

    def rd(name):
        r0, nr, nc = layout[name]
        return slab_ref[r0:r0 + nr, 0:nc]        # static slice of the slab

    def layer_norm(v, g, b):
        # two independent reductions: var = E[x^2] - E[x]^2
        mu = jnp.mean(v, axis=-1, keepdims=True)
        ms = jnp.mean(v * v, axis=-1, keepdims=True)
        var = ms - mu * mu
        return (v - mu) * jax.lax.rsqrt(var + LN_EPS) * g + b

    def gelu(v):
        # TODO(synk): HF BERT default is exact erf-GELU; tanh approximation used here.
        return 0.5 * v * (1.0 + jnp.tanh(0.7978845608028654 *
                                         (v + 0.044715 * v * v * v)))

    # ---------------- embeddings (gather done in-kernel via one-hot matmul) ----
    ids = ids_ref[...]                                               # (B*S, 1) i32
    vocab_iota = jax.lax.broadcasted_iota(jnp.int32, (batch * seq, VOCAB_SIZE), 1)
    onehot = (vocab_iota == ids).astype(f32)                         # (B*S, V)
    emb = jnp.dot(onehot, rd("word_emb"),
                  preferred_element_type=f32) + rd("pos_tok")        # (B*S, H)
    h = layer_norm(emb, rd("emb_ln_g"), rd("emb_ln_b"))

    # additive attention-mask bias, built once from the raw int mask
    maskf = mask_ref[...].astype(f32)                                # (B, S)
    bias = (1.0 - maskf) * -10000.0                                  # (B, S)
    # batch order of the head-packed attention is (head, batch)
    bias3 = jnp.tile(bias, (NUM_HEADS, 1)).reshape(NUM_HEADS * batch, 1, seq)

    scale = 1.0 / math.sqrt(HEAD_DIM)

    for l in range(NUM_LAYERS):
        p = f"l{l}_"

        # fused QKV projection, lane-padded to a full 128-wide vreg
        qkv = jnp.dot(h, rd(p + "wqkv"),
                      preferred_element_type=f32) + rd(p + "bqkv")   # (B*S, 128)

        # pack heads into one batch axis: (NUM_HEADS*B, S, D), order (head, batch)
        def split_heads(base):
            return jnp.concatenate(
                [qkv[:, base + hd * HEAD_DIM: base + (hd + 1) * HEAD_DIM]
                    .reshape(batch, seq, HEAD_DIM)
                 for hd in range(NUM_HEADS)], axis=0)

        q = split_heads(0)
        k = split_heads(HIDDEN)
        v = split_heads(2 * HIDDEN)

        # one batched scores einsum + one batched context einsum per layer
        s = jnp.einsum("bqd,bkd->bqk", q, k,
                       preferred_element_type=f32) * scale + bias3   # (NH*B, S, S)
        m = jnp.max(s, axis=-1, keepdims=True)
        e = jnp.exp(s - m)
        probs = e * pl.reciprocal(jnp.sum(e, axis=-1, keepdims=True), approx=True)
        ctx = jnp.einsum("bqk,bkd->bqd", probs, v,
                         preferred_element_type=f32)                 # (NH*B, S, D)

        # merge heads back to (B*S, H) (head-major lane order, matches BERT)
        ctx2d = jnp.concatenate(
            [ctx[hd * batch:(hd + 1) * batch].reshape(batch * seq, HEAD_DIM)
             for hd in range(NUM_HEADS)], axis=1)                    # (B*S, H)

        # single merged output projection
        attn = jnp.dot(ctx2d, rd(p + "wo"),
                       preferred_element_type=f32) + rd(p + "bo")
        h = layer_norm(attn + h, rd(p + "ln1_g"), rd(p + "ln1_b"))

        # feed-forward
        inter = gelu(jnp.dot(h, rd(p + "wi"),
                             preferred_element_type=f32) + rd(p + "bi"))
        ffn = jnp.dot(inter, rd(p + "wo2"),
                      preferred_element_type=f32) + rd(p + "bo2")
        h = layer_norm(ffn + h, rd(p + "ln2_g"), rd(p + "ln2_b"))

    # pooler: CLS rows gathered via precomputed selection matmul (from the slab)
    cls = jnp.dot(rd("sel"), h, preferred_element_type=f32)          # (B, H)
    pooled = jnp.tanh(jnp.dot(cls, rd("pool_w"),
                              preferred_element_type=f32) + rd("pool_b"))

    # classifier: lane-dense padded (B, 128); sliced to NUM_CLASSES in JAX
    out_ref[...] = jnp.dot(pooled, rd("fc_w"),
                           preferred_element_type=f32) + rd("fc_b")


# ----------------------------- params -----------------------------
def init_params(key):
    keys = iter(jax.random.split(key, 256))

    def nrm(*shape):
        return 0.02 * jax.random.normal(next(keys), shape, jnp.float32)

    def zeros(*shape):
        return jnp.zeros(shape, jnp.float32)

    def ones(*shape):
        return jnp.ones(shape, jnp.float32)

    params = {
        "word_emb": nrm(VOCAB_SIZE, HIDDEN),
        "pos_emb":  nrm(MAX_POS, HIDDEN),
        "tok_emb":  nrm(2, HIDDEN),
        "emb_ln_g": ones(HIDDEN),
        "emb_ln_b": zeros(HIDDEN),
        "layers": [],
        "pool_w": nrm(HIDDEN, HIDDEN),
        "pool_b": zeros(HIDDEN),
        "fc_w":   nrm(HIDDEN, NUM_CLASSES),
        "fc_b":   zeros(NUM_CLASSES),
    }
    for _ in range(NUM_LAYERS):
        params["layers"].append({
            # weights stored (in, out); equivalent to torch Linear weight.T
            "wq": nrm(HIDDEN, HIDDEN), "bq": zeros(HIDDEN),
            "wk": nrm(HIDDEN, HIDDEN), "bk": zeros(HIDDEN),
            "wv": nrm(HIDDEN, HIDDEN), "bv": zeros(HIDDEN),
            "wo": nrm(HIDDEN, HIDDEN), "bo": zeros(HIDDEN),
            "ln1_g": ones(HIDDEN), "ln1_b": zeros(HIDDEN),
            "wi":  nrm(HIDDEN, INTERMEDIATE), "bi":  zeros(INTERMEDIATE),
            "wo2": nrm(INTERMEDIATE, HIDDEN), "bo2": zeros(HIDDEN),
            "ln2_g": ones(HIDDEN), "ln2_b": zeros(HIDDEN),
        })
    return params


def pack_params(params, batch, seq):
    """One-time pre-pack of all parameters into a single (R, 128) f32 slab."""
    layout, total_rows = _build_layout(batch, seq)
    slab = np.zeros((total_rows, SLAB_W), np.float32)

    def put(name, value):
        value = np.asarray(value, np.float32)
        if value.ndim == 1:
            value = value.reshape(1, -1)
        r0, nr, _ = layout[name]
        assert value.shape[0] == nr
        slab[r0:r0 + nr, :value.shape[1]] = value

    put("word_emb", params["word_emb"])
    # precomputed position + token-type(0) embeddings for every (b, s) row
    pos_tok = (np.tile(np.asarray(params["pos_emb"])[:seq], (batch, 1))
               + np.asarray(params["tok_emb"])[0][None, :])
    put("pos_tok", pos_tok)
    put("emb_ln_g", params["emb_ln_g"])
    put("emb_ln_b", params["emb_ln_b"])

    for l, lyr in enumerate(params["layers"]):
        p = f"l{l}_"
        wqkv = np.concatenate([np.asarray(lyr["wq"]), np.asarray(lyr["wk"]),
                               np.asarray(lyr["wv"])], axis=1)        # (H, 3H)
        bqkv = np.concatenate([np.asarray(lyr["bq"]), np.asarray(lyr["bk"]),
                               np.asarray(lyr["bv"])]).reshape(1, 3 * HIDDEN)
        put(p + "wqkv", wqkv)            # lanes 96:128 stay zero-padded
        put(p + "bqkv", bqkv)
        put(p + "wo", lyr["wo"])
        put(p + "bo", lyr["bo"])
        put(p + "ln1_g", lyr["ln1_g"])
        put(p + "ln1_b", lyr["ln1_b"])
        put(p + "wi", lyr["wi"])
        put(p + "bi", lyr["bi"])
        put(p + "wo2", lyr["wo2"])
        put(p + "bo2", lyr["bo2"])
        put(p + "ln2_g", lyr["ln2_g"])
        put(p + "ln2_b", lyr["ln2_b"])

    put("pool_w", params["pool_w"])
    put("pool_b", params["pool_b"])
    put("fc_w", params["fc_w"])          # zero-padded to CLASS_PAD lanes
    put("fc_b", params["fc_b"])

    sel = np.zeros((batch, batch * seq), np.float32)
    sel[np.arange(batch), np.arange(batch) * seq] = 1.0
    put("sel", sel)

    return jnp.asarray(slab)


# ----------------------------- forward -----------------------------
def build_forward(batch, seq):
    layout, _total_rows = _build_layout(batch, seq)
    kernel = functools.partial(_bert_kernel, batch=batch, seq=seq, layout=layout)

    @jax.jit
    def fwd(slab, context, mask):
        ids = context.reshape(batch * seq, 1).astype(jnp.int32)
        padded = pl.pallas_call(
            kernel,
            out_shape=jax.ShapeDtypeStruct((batch, CLASS_PAD), jnp.float32),
            in_specs=[pl.BlockSpec(memory_space=pltpu.MemorySpace.VMEM)] * 3,
            out_specs=pl.BlockSpec(memory_space=pltpu.MemorySpace.VMEM),
        )(slab, ids, mask.astype(jnp.int32))
        return padded[:, :NUM_CLASSES]                               # (B, NUM_CLASSES)

    return fwd


def model_forward(slab, fwd, x):
    context, _seq_len, mask = x          # matches x[0] / x[2] of the torch module
    return fwd(slab, context, mask)


# ----------------------------- main -----------------------------
if __name__ == "__main__":
    key = jax.random.PRNGKey(0)
    pkey, ckey = jax.random.split(key)

    params = init_params(pkey)
    slab = pack_params(params, BATCH, SEQ)        # one-time parameter pre-pack

    context = jax.random.randint(ckey, (BATCH, SEQ), 0, VOCAB_SIZE, dtype=jnp.int32)
    seq_len = jnp.full((BATCH,), SEQ, dtype=jnp.int32)               # unused, mirrors x[1]
    mask = jnp.ones((BATCH, SEQ), jnp.int32).at[1, 6:].set(0)        # pad last 2 tokens of sample 1
    x = (context, seq_len, mask)

    fwd = build_forward(BATCH, SEQ)
    out = model_forward(slab, fwd, x)
    jax.block_until_ready(out)

    assert out.shape == (BATCH, NUM_CLASSES)
    assert bool(jnp.all(jnp.isfinite(out)))
    print("KERNEL_OK")
</pallas_src>

<mosaic_0001>
module attributes {stable_mosaic.version = 11 : i64} {
  func.func @_bert_kernel(%arg0: memref<632x128xf32, #tpu.memory_space<vmem>>, %arg1: memref<16x1xi32, #tpu.memory_space<vmem>>, %arg2: memref<2x8xi32, #tpu.memory_space<vmem>>, %arg3: memref<2x128xf32, #tpu.memory_space<vmem>>) attributes {dimension_semantics = [], scalar_prefetch = 0 : i64, scratch_operands = 0 : i64, tpu.core_type = #tpu.core_type<tc>} {
    %c0 = arith.constant 0 : index
    %c0_0 = arith.constant 0 : index
    %0 = vector.load %arg1[%c0, %c0_0] : memref<16x1xi32, #tpu.memory_space<vmem>>, vector<16x1xi32>
    %1 = tpu.iota {dimensions = array<i32: 1>} : vector<16x64xi32>
    %2 = vector.broadcast %0 : vector<16x1xi32> to vector<16x64xi32>
    %3 = arith.cmpi eq, %1, %2 : vector<16x64xi32>
    %4 = arith.extui %3 : vector<16x64xi1> to vector<16x64xi32>
    %5 = arith.sitofp %4 : vector<16x64xi32> to vector<16x64xf32>
    %c0_1 = arith.constant 0 : index
    %c0_2 = arith.constant 0 : index
    %6 = vector.load %arg0[%c0_1, %c0_2] : memref<632x128xf32, #tpu.memory_space<vmem>>, vector<64x32xf32>
    %cst = arith.constant dense<0.000000e+00> : vector<16x32xf32>
    %7 = tpu.matmul %5, %6, %cst {dimension_numbers = #tpu.dot_dimension_numbers<[1], [0], [0], [1], [0, 0, 1, 1], [], []>} : vector<16x64xf32>, vector<64x32xf32>, vector<16x32xf32> -> vector<16x32xf32>
    %c64 = arith.constant 64 : index
    %c0_3 = arith.constant 0 : index
    %8 = vector.load %arg0[%c64, %c0_3] : memref<632x128xf32, #tpu.memory_space<vmem>>, vector<16x32xf32>
    %9 = arith.addf %7, %8 : vector<16x32xf32>
    %c80 = arith.constant 80 : index
    %c0_4 = arith.constant 0 : index
    %10 = vector.load %arg0[%c80, %c0_4] : memref<632x128xf32, #tpu.memory_space<vmem>>, vector<1x32xf32>
    %c88 = arith.constant 88 : index
    %c0_5 = arith.constant 0 : index
    %11 = vector.load %arg0[%c88, %c0_5] : memref<632x128xf32, #tpu.memory_space<vmem>>, vector<1x32xf32>
    %cst_6 = arith.constant dense<0.000000e+00> : vector<16xf32>
    %12 = vector.multi_reduction <add>, %9, %cst_6 [1] : vector<16x32xf32> to vector<16xf32>
    %13 = vector.shape_cast %12 : vector<16xf32> to vector<16x1xf32>
    %cst_7 = arith.constant 3.200000e+01 : f32
    %14 = vector.broadcast %cst_7 : f32 to vector<16x1xf32>
    %15 = arith.divf %13, %14 : vector<16x1xf32>
    %16 = arith.mulf %9, %9 : vector<16x32xf32>
    %cst_8 = arith.constant dense<0.000000e+00> : vector<16xf32>
    %17 = vector.multi_reduction <add>, %16, %cst_8 [1] : vector<16x32xf32> to vector<16xf32>
    %18 = vector.shape_cast %17 : vector<16xf32> to vector<16x1xf32>
    %cst_9 = arith.constant 3.200000e+01 : f32
    %19 = vector.broadcast %cst_9 : f32 to vector<16x1xf32>
    %20 = arith.divf %18, %19 : vector<16x1xf32>
    %21 = arith.mulf %15, %15 : vector<16x1xf32>
    %22 = arith.subf %20, %21 : vector<16x1xf32>
    %23 = vector.broadcast %15 : vector<16x1xf32> to vector<16x32xf32>
    %24 = arith.subf %9, %23 : vector<16x32xf32>
    %cst_10 = arith.constant 9.99999996E-13 : f32
    %25 = vector.broadcast %cst_10 : f32 to vector<16x1xf32>
    %26 = arith.addf %22, %25 : vector<16x1xf32>
    %27 = math.rsqrt %26 : vector<16x1xf32>
    %28 = vector.broadcast %27 : vector<16x1xf32> to vector<16x32xf32>
    %29 = arith.mulf %24, %28 : vector<16x32xf32>
    %30 = vector.broadcast %10 : vector<1x32xf32> to vector<16x32xf32>
    %31 = arith.mulf %29, %30 : vector<16x32xf32>
    %32 = vector.broadcast %11 : vector<1x32xf32> to vector<16x32xf32>
    %33 = arith.addf %31, %32 : vector<16x32xf32>
    %c0_11 = arith.constant 0 : index
    %c0_12 = arith.constant 0 : index
    %34 = vector.load %arg2[%c0_11, %c0_12] : memref<2x8xi32, #tpu.memory_space<vmem>>, vector<2x8xi32>
    %35 = arith.sitofp %34 : vector<2x8xi32> to vector<2x8xf32>
    %cst_13 = arith.constant 1.000000e+00 : f32
    %36 = vector.broadcast %cst_13 : f32 to vector<2x8xf32>
    %37 = arith.subf %36, %35 : vector<2x8xf32>
    %cst_14 = arith.constant -1.000000e+04 : f32
    %38 = vector.broadcast %cst_14 : f32 to vector<2x8xf32>
    %39 = arith.mulf %37, %38 : vector<2x8xf32>
    %40 = tpu.concatenate %39, %39, %39, %39 in 0 : vector<2x8xf32>, vector<2x8xf32>, vector<2x8xf32>, vector<2x8xf32> -> vector<8x8xf32>
    %41 = vector.shape_cast %40 : vector<8x8xf32> to vector<8x1x8xf32>
    %c96 = arith.constant 96 : index
    %c0_15 = arith.constant 0 : index
    %42 = vector.load %arg0[%c96, %c0_15] : memref<632x128xf32, #tpu.memory_space<vmem>>, vector<32x128xf32>
    %cst_16 = arith.constant dense<0.000000e+00> : vector<16x128xf32>
    %43 = tpu.matmul %33, %42, %cst_16 {dimension_numbers = #tpu.dot_dimension_numbers<[1], [0], [0], [1], [0, 0, 1, 1], [], []>} : vector<16x32xf32>, vector<32x128xf32>, vector<16x128xf32> -> vector<16x128xf32>
    %c128 = arith.constant 128 : index
    %c0_17 = arith.constant 0 : index
    %44 = vector.load %arg0[%c128, %c0_17] : memref<632x128xf32, #tpu.memory_space<vmem>>, vector<1x128xf32>
    %45 = vector.broadcast %44 : vector<1x128xf32> to vector<16x128xf32>
    %46 = arith.addf %43, %45 : vector<16x128xf32>
    %47 = vector.extract_strided_slice %46 {offsets = [0, 0], sizes = [16, 8], strides = [1, 1]} : vector<16x128xf32> to vector<16x8xf32>
    %48 = vector.shape_cast %47 : vector<16x8xf32> to vector<2x8x8xf32>
    %49 = vector.extract_strided_slice %46 {offsets = [0, 8], sizes = [16, 8], strides = [1, 1]} : vector<16x128xf32> to vector<16x8xf32>
    %50 = vector.shape_cast %49 : vector<16x8xf32> to vector<2x8x8xf32>
    %51 = vector.extract_strided_slice %46 {offsets = [0, 16], sizes = [16, 8], strides = [1, 1]} : vector<16x128xf32> to vector<16x8xf32>
    %52 = vector.shape_cast %51 : vector<16x8xf32> to vector<2x8x8xf32>
    %53 = vector.extract_strided_slice %46 {offsets = [0, 24], sizes = [16, 8], strides = [1, 1]} : vector<16x128xf32> to vector<16x8xf32>
    %54 = vector.shape_cast %53 : vector<16x8xf32> to vector<2x8x8xf32>
    %55 = tpu.concatenate %48, %50, %52, %54 in 0 : vector<2x8x8xf32>, vector<2x8x8xf32>, vector<2x8x8xf32>, vector<2x8x8xf32> -> vector<8x8x8xf32>
    %56 = vector.extract_strided_slice %46 {offsets = [0, 32], sizes = [16, 8], strides = [1, 1]} : vector<16x128xf32> to vector<16x8xf32>
    %57 = vector.shape_cast %56 : vector<16x8xf32> to vector<2x8x8xf32>
    %58 = vector.extract_strided_slice %46 {offsets = [0, 40], sizes = [16, 8], strides = [1, 1]} : vector<16x128xf32> to vector<16x8xf32>
    %59 = vector.shape_cast %58 : vector<16x8xf32> to vector<2x8x8xf32>
    %60 = vector.extract_strided_slice %46 {offsets = [0, 48], sizes = [16, 8], strides = [1, 1]} : vector<16x128xf32> to vector<16x8xf32>
    %61 = vector.shape_cast %60 : vector<16x8xf32> to vector<2x8x8xf32>
    %62 = vector.extract_strided_slice %46 {offsets = [0, 56], sizes = [16, 8], strides = [1, 1]} : vector<16x128xf32> to vector<16x8xf32>
    %63 = vector.shape_cast %62 : vector<16x8xf32> to vector<2x8x8xf32>
    %64 = tpu.concatenate %57, %59, %61, %63 in 0 : vector<2x8x8xf32>, vector<2x8x8xf32>, vector<2x8x8xf32>, vector<2x8x8xf32> -> vector<8x8x8xf32>
    %65 = vector.extract_strided_slice %46 {offsets = [0, 64], sizes = [16, 8], strides = [1, 1]} : vector<16x128xf32> to vector<16x8xf32>
    %66 = vector.shape_cast %65 : vector<16x8xf32> to vector<2x8x8xf32>
    %67 = vector.extract_strided_slice %46 {offsets = [0, 72], sizes = [16, 8], strides = [1, 1]} : vector<16x128xf32> to vector<16x8xf32>
    %68 = vector.shape_cast %67 : vector<16x8xf32> to vector<2x8x8xf32>
    %69 = vector.extract_strided_slice %46 {offsets = [0, 80], sizes = [16, 8], strides = [1, 1]} : vector<16x128xf32> to vector<16x8xf32>
    %70 = vector.shape_cast %69 : vector<16x8xf32> to vector<2x8x8xf32>
    %71 = vector.extract_strided_slice %46 {offsets = [0, 88], sizes = [16, 8], strides = [1, 1]} : vector<16x128xf32> to vector<16x8xf32>
    %72 = vector.shape_cast %71 : vector<16x8xf32> to vector<2x8x8xf32>
    %73 = tpu.concatenate %66, %68, %70, %72 in 0 : vector<2x8x8xf32>, vector<2x8x8xf32>, vector<2x8x8xf32>, vector<2x8x8xf32> -> vector<8x8x8xf32>
    "tpu.trace_start"() <{level = 10 : i32, message = "bqd,bkd->bqk"}> : () -> ()
    %cst_18 = arith.constant dense<0.000000e+00> : vector<8x8x8xf32>
    %74 = tpu.matmul %55, %64, %cst_18 {dimension_numbers = #tpu.dot_dimension_numbers<[2], [2], [1], [1], [0, 0, 0, 1, 1, 1], [0], [0]>} : vector<8x8x8xf32>, vector<8x8x8xf32>, vector<8x8x8xf32> -> vector<8x8x8xf32>
    "tpu.trace_stop"() : () -> ()
    %cst_19 = arith.constant 0.353553385 : f32
    %75 = vector.broadcast %cst_19 : f32 to vector<8x8x8xf32>
    %76 = arith.mulf %74, %75 : vector<8x8x8xf32>
    %77 = vector.broadcast %41 : vector<8x1x8xf32> to vector<8x8x8xf32>
    %78 = arith.addf %76, %77 : vector<8x8x8xf32>
    %cst_20 = arith.constant dense<0xFF800000> : vector<8x8xf32>
    %79 = vector.multi_reduction <maximumf>, %78, %cst_20 [2] : vector<8x8x8xf32> to vector<8x8xf32>
    %80 = vector.shape_cast %79 : vector<8x8xf32> to vector<8x8x1xf32>
    %81 = vector.broadcast %80 : vector<8x8x1xf32> to vector<8x8x8xf32>
    %82 = arith.subf %78, %81 : vector<8x8x8xf32>
    %83 = math.exp %82 : vector<8x8x8xf32>
    %cst_21 = arith.constant dense<0.000000e+00> : vector<8x8xf32>
    %84 = vector.multi_reduction <add>, %83, %cst_21 [2] : vector<8x8x8xf32> to vector<8x8xf32>
    %85 = vector.shape_cast %84 : vector<8x8xf32> to vector<8x8x1xf32>
    %86 = tpu.reciprocal %85 {approx = true} : vector<8x8x1xf32> -> vector<8x8x1xf32>
    %87 = vector.broadcast %86 : vector<8x8x1xf32> to vector<8x8x8xf32>
    %88 = arith.mulf %83, %87 : vector<8x8x8xf32>
    "tpu.trace_start"() <{level = 10 : i32, message = "bqk,bkd->bqd"}> : () -> ()
    %cst_22 = arith.constant dense<0.000000e+00> : vector<8x8x8xf32>
    %89 = tpu.matmul %88, %73, %cst_22 {dimension_numbers = #tpu.dot_dimension_numbers<[2], [1], [1], [2], [0, 0, 0, 1, 1, 2], [0], [0]>} : vector<8x8x8xf32>, vector<8x8x8xf32>, vector<8x8x8xf32> -> vector<8x8x8xf32>
    "tpu.trace_stop"() : () -> ()
    %90 = vector.extract_strided_slice %89 {offsets = [0, 0, 0], sizes = [2, 8, 8], strides = [1, 1, 1]} : vector<8x8x8xf32> to vector<2x8x8xf32>
    %91 = vector.shape_cast %90 : vector<2x8x8xf32> to vector<16x8xf32>
    %92 = vector.extract_strided_slice %89 {offsets = [2, 0, 0], sizes = [2, 8, 8], strides = [1, 1, 1]} : vector<8x8x8xf32> to vector<2x8x8xf32>
    %93 = vector.shape_cast %92 : vector<2x8x8xf32> to vector<16x8xf32>
    %94 = vector.extract_strided_slice %89 {offsets = [4, 0, 0], sizes = [2, 8, 8], strides = [1, 1, 1]} : vector<8x8x8xf32> to vector<2x8x8xf32>
    %95 = vector.shape_cast %94 : vector<2x8x8xf32> to vector<16x8xf32>
    %96 = vector.extract_strided_slice %89 {offsets = [6, 0, 0], sizes = [2, 8, 8], strides = [1, 1, 1]} : vector<8x8x8xf32> to vector<2x8x8xf32>
    %97 = vector.shape_cast %96 : vector<2x8x8xf32> to vector<16x8xf32>
    %98 = tpu.concatenate %91, %93, %95, %97 in 1 : vector<16x8xf32>, vector<16x8xf32>, vector<16x8xf32>, vector<16x8xf32> -> vector<16x32xf32>
    %c136 = arith.constant 136 : index
    %c0_23 = arith.constant 0 : index
    %99 = vector.load %arg0[%c136, %c0_23] : memref<632x128xf32, #tpu.memory_space<vmem>>, vector<32x32xf32>
    %cst_24 = arith.constant dense<0.000000e+00> : vector<16x32xf32>
    %100 = tpu.matmul %98, %99, %cst_24 {dimension_numbers = #tpu.dot_dimension_numbers<[1], [0], [0], [1], [0, 0, 1, 1], [], []>} : vector<16x32xf32>, vector<32x32xf32>, vector<16x32xf32> -> vector<16x32xf32>
    %c168 = arith.constant 168 : index
    %c0_25 = arith.constant 0 : index
    %101 = vector.load %arg0[%c168, %c0_25] : memref<632x128xf32, #tpu.memory_space<vmem>>, vector<1x32xf32>
    %102 = vector.broadcast %101 : vector<1x32xf32> to vector<16x32xf32>
    %103 = arith.addf %100, %102 : vector<16x32xf32>
    %104 = arith.addf %103, %33 : vector<16x32xf32>
    %c176 = arith.constant 176 : index
    %c0_26 = arith.constant 0 : index
    %105 = vector.load %arg0[%c176, %c0_26] : memref<632x128xf32, #tpu.memory_space<vmem>>, vector<1x32xf32>
    %c184 = arith.constant 184 : index
    %c0_27 = arith.constant 0 : index
    %106 = vector.load %arg0[%c184, %c0_27] : memref<632x128xf32, #tpu.memory_space<vmem>>, vector<1x32xf32>
    %cst_28 = arith.constant dense<0.000000e+00> : vector<16xf32>
    %107 = vector.multi_reduction <add>, %104, %cst_28 [1] : vector<16x32xf32> to vector<16xf32>
    %108 = vector.shape_cast %107 : vector<16xf32> to vector<16x1xf32>
    %cst_29 = arith.constant 3.200000e+01 : f32
    %109 = vector.broadcast %cst_29 : f32 to vector<16x1xf32>
    %110 = arith.divf %108, %109 : vector<16x1xf32>
    %111 = arith.mulf %104, %104 : vector<16x32xf32>
    %cst_30 = arith.constant dense<0.000000e+00> : vector<16xf32>
    %112 = vector.multi_reduction <add>, %111, %cst_30 [1] : vector<16x32xf32> to vector<16xf32>
    %113 = vector.shape_cast %112 : vector<16xf32> to vector<16x1xf32>
    %cst_31 = arith.constant 3.200000e+01 : f32
    %114 = vector.broadcast %cst_31 : f32 to vector<16x1xf32>
    %115 = arith.divf %113, %114 : vector<16x1xf32>
    %116 = arith.mulf %110, %110 : vector<16x1xf32>
    %117 = arith.subf %115, %116 : vector<16x1xf32>
    %118 = vector.broadcast %110 : vector<16x1xf32> to vector<16x32xf32>
    %119 = arith.subf %104, %118 : vector<16x32xf32>
    %cst_32 = arith.constant 9.99999996E-13 : f32
    %120 = vector.broadcast %cst_32 : f32 to vector<16x1xf32>
    %121 = arith.addf %117, %120 : vector<16x1xf32>
    %122 = math.rsqrt %121 : vector<16x1xf32>
    %123 = vector.broadcast %122 : vector<16x1xf32> to vector<16x32xf32>
    %124 = arith.mulf %119, %123 : vector<16x32xf32>
    %125 = vector.broadcast %105 : vector<1x32xf32> to vector<16x32xf32>
    %126 = arith.mulf %124, %125 : vector<16x32xf32>
    %127 = vector.broadcast %106 : vector<1x32xf32> to vector<16x32xf32>
    %128 = arith.addf %126, %127 : vector<16x32xf32>
    %c192 = arith.constant 192 : index
    %c0_33 = arith.constant 0 : index
    %129 = vector.load %arg0[%c192, %c0_33] : memref<632x128xf32, #tpu.memory_space<vmem>>, vector<32x64xf32>
    %cst_34 = arith.constant dense<0.000000e+00> : vector<16x64xf32>
    %130 = tpu.matmul %128, %129, %cst_34 {dimension_numbers = #tpu.dot_dimension_numbers<[1], [0], [0], [1], [0, 0, 1, 1], [], []>} : vector<16x32xf32>, vector<32x64xf32>, vector<16x64xf32> -> vector<16x64xf32>
    %c224 = arith.constant 224 : index
    %c0_35 = arith.constant 0 : index
    %131 = vector.load %arg0[%c224, %c0_35] : memref<632x128xf32, #tpu.memory_space<vmem>>, vector<1x64xf32>
    %132 = vector.broadcast %131 : vector<1x64xf32> to vector<16x64xf32>
    %133 = arith.addf %130, %132 : vector<16x64xf32>
    %cst_36 = arith.constant 5.000000e-01 : f32
    %134 = vector.broadcast %cst_36 : f32 to vector<16x64xf32>
    %135 = arith.mulf %134, %133 : vector<16x64xf32>
    %cst_37 = arith.constant 4.471500e-02 : f32
    %136 = vector.broadcast %cst_37 : f32 to vector<16x64xf32>
    %137 = arith.mulf %136, %133 : vector<16x64xf32>
    %138 = arith.mulf %137, %133 : vector<16x64xf32>
    %139 = arith.mulf %138, %133 : vector<16x64xf32>
    %140 = arith.addf %133, %139 : vector<16x64xf32>
    %cst_38 = arith.constant 0.797884583 : f32
    %141 = vector.broadcast %cst_38 : f32 to vector<16x64xf32>
    %142 = arith.mulf %141, %140 : vector<16x64xf32>
    %143 = math.tanh %142 : vector<16x64xf32>
    %cst_39 = arith.constant 1.000000e+00 : f32
    %144 = vector.broadcast %cst_39 : f32 to vector<16x64xf32>
    %145 = arith.addf %144, %143 : vector<16x64xf32>
    %146 = arith.mulf %135, %145 : vector<16x64xf32>
    %c232 = arith.constant 232 : index
    %c0_40 = arith.constant 0 : index
    %147 = vector.load %arg0[%c232, %c0_40] : memref<632x128xf32, #tpu.memory_space<vmem>>, vector<64x32xf32>
    %cst_41 = arith.constant dense<0.000000e+00> : vector<16x32xf32>
    %148 = tpu.matmul %146, %147, %cst_41 {dimension_numbers = #tpu.dot_dimension_numbers<[1], [0], [0], [1], [0, 0, 1, 1], [], []>} : vector<16x64xf32>, vector<64x32xf32>, vector<16x32xf32> -> vector<16x32xf32>
    %c296 = arith.constant 296 : index
    %c0_42 = arith.constant 0 : index
    %149 = vector.load %arg0[%c296, %c0_42] : memref<632x128xf32, #tpu.memory_space<vmem>>, vector<1x32xf32>
    %150 = vector.broadcast %149 : vector<1x32xf32> to vector<16x32xf32>
    %151 = arith.addf %148, %150 : vector<16x32xf32>
    %152 = arith.addf %151, %128 : vector<16x32xf32>
    %c304 = arith.constant 304 : index
    %c0_43 = arith.constant 0 : index
    %153 = vector.load %arg0[%c304, %c0_43] : memref<632x128xf32, #tpu.memory_space<vmem>>, vector<1x32xf32>
    %c312 = arith.constant 312 : index
    %c0_44 = arith.constant 0 : index
    %154 = vector.load %arg0[%c312, %c0_44] : memref<632x128xf32, #tpu.memory_space<vmem>>, vector<1x32xf32>
    %cst_45 = arith.constant dense<0.000000e+00> : vector<16xf32>
    %155 = vector.multi_reduction <add>, %152, %cst_45 [1] : vector<16x32xf32> to vector<16xf32>
    %156 = vector.shape_cast %155 : vector<16xf32> to vector<16x1xf32>
    %cst_46 = arith.constant 3.200000e+01 : f32
    %157 = vector.broadcast %cst_46 : f32 to vector<16x1xf32>
    %158 = arith.divf %156, %157 : vector<16x1xf32>
    %159 = arith.mulf %152, %152 : vector<16x32xf32>
    %cst_47 = arith.constant dense<0.000000e+00> : vector<16xf32>
    %160 = vector.multi_reduction <add>, %159, %cst_47 [1] : vector<16x32xf32> to vector<16xf32>
    %161 = vector.shape_cast %160 : vector<16xf32> to vector<16x1xf32>
    %cst_48 = arith.constant 3.200000e+01 : f32
    %162 = vector.broadcast %cst_48 : f32 to vector<16x1xf32>
    %163 = arith.divf %161, %162 : vector<16x1xf32>
    %164 = arith.mulf %158, %158 : vector<16x1xf32>
    %165 = arith.subf %163, %164 : vector<16x1xf32>
    %166 = vector.broadcast %158 : vector<16x1xf32> to vector<16x32xf32>
    %167 = arith.subf %152, %166 : vector<16x32xf32>
    %cst_49 = arith.constant 9.99999996E-13 : f32
    %168 = vector.broadcast %cst_49 : f32 to vector<16x1xf32>
    %169 = arith.addf %165, %168 : vector<16x1xf32>
    %170 = math.rsqrt %169 : vector<16x1xf32>
    %171 = vector.broadcast %170 : vector<16x1xf32> to vector<16x32xf32>
    %172 = arith.mulf %167, %171 : vector<16x32xf32>
    %173 = vector.broadcast %153 : vector<1x32xf32> to vector<16x32xf32>
    %174 = arith.mulf %172, %173 : vector<16x32xf32>
    %175 = vector.broadcast %154 : vector<1x32xf32> to vector<16x32xf32>
    %176 = arith.addf %174, %175 : vector<16x32xf32>
    %c320 = arith.constant 320 : index
    %c0_50 = arith.constant 0 : index
    %177 = vector.load %arg0[%c320, %c0_50] : memref<632x128xf32, #tpu.memory_space<vmem>>, vector<32x128xf32>
    %cst_51 = arith.constant dense<0.000000e+00> : vector<16x128xf32>
    %178 = tpu.matmul %176, %177, %cst_51 {dimension_numbers = #tpu.dot_dimension_numbers<[1], [0], [0], [1], [0, 0, 1, 1], [], []>} : vector<16x32xf32>, vector<32x128xf32>, vector<16x128xf32> -> vector<16x128xf32>
    %c352 = arith.constant 352 : index
    %c0_52 = arith.constant 0 : index
    %179 = vector.load %arg0[%c352, %c0_52] : memref<632x128xf32, #tpu.memory_space<vmem>>, vector<1x128xf32>
    %180 = vector.broadcast %179 : vector<1x128xf32> to vector<16x128xf32>
    %181 = arith.addf %178, %180 : vector<16x128xf32>
    %182 = vector.extract_strided_slice %181 {offsets = [0, 0], sizes = [16, 8], strides = [1, 1]} : vector<16x128xf32> to vector<16x8xf32>
    %183 = vector.shape_cast %182 : vector<16x8xf32> to vector<2x8x8xf32>
    %184 = vector.extract_strided_slice %181 {offsets = [0, 8], sizes = [16, 8], strides = [1, 1]} : vector<16x128xf32> to vector<16x8xf32>
    %185 = vector.shape_cast %184 : vector<16x8xf32> to vector<2x8x8xf32>
    %186 = vector.extract_strided_slice %181 {offsets = [0, 16], sizes = [16, 8], strides = [1, 1]} : vector<16x128xf32> to vector<16x8xf32>
    %187 = vector.shape_cast %186 : vector<16x8xf32> to vector<2x8x8xf32>
    %188 = vector.extract_strided_slice %181 {offsets = [0, 24], sizes = [16, 8], strides = [1, 1]} : vector<16x128xf32> to vector<16x8xf32>
    %189 = vector.shape_cast %188 : vector<16x8xf32> to vector<2x8x8xf32>
    %190 = tpu.concatenate %183, %185, %187, %189 in 0 : vector<2x8x8xf32>, vector<2x8x8xf32>, vector<2x8x8xf32>, vector<2x8x8xf32> -> vector<8x8x8xf32>
    %191 = vector.extract_strided_slice %181 {offsets = [0, 32], sizes = [16, 8], strides = [1, 1]} : vector<16x128xf32> to vector<16x8xf32>
    %192 = vector.shape_cast %191 : vector<16x8xf32> to vector<2x8x8xf32>
    %193 = vector.extract_strided_slice %181 {offsets = [0, 40], sizes = [16, 8], strides = [1, 1]} : vector<16x128xf32> to vector<16x8xf32>
    %194 = vector.shape_cast %193 : vector<16x8xf32> to vector<2x8x8xf32>
    %195 = vector.extract_strided_slice %181 {offsets = [0, 48], sizes = [16, 8], strides = [1, 1]} : vector<16x128xf32> to vector<16x8xf32>
    %196 = vector.shape_cast %195 : vector<16x8xf32> to vector<2x8x8xf32>
    %197 = vector.extract_strided_slice %181 {offsets = [0, 56], sizes = [16, 8], strides = [1, 1]} : vector<16x128xf32> to vector<16x8xf32>
    %198 = vector.shape_cast %197 : vector<16x8xf32> to vector<2x8x8xf32>
    %199 = tpu.concatenate %192, %194, %196, %198 in 0 : vector<2x8x8xf32>, vector<2x8x8xf32>, vector<2x8x8xf32>, vector<2x8x8xf32> -> vector<8x8x8xf32>
    %200 = vector.extract_strided_slice %181 {offsets = [0, 64], sizes = [16, 8], strides = [1, 1]} : vector<16x128xf32> to vector<16x8xf32>
    %201 = vector.shape_cast %200 : vector<16x8xf32> to vector<2x8x8xf32>
    %202 = vector.extract_strided_slice %181 {offsets = [0, 72], sizes = [16, 8], strides = [1, 1]} : vector<16x128xf32> to vector<16x8xf32>
    %203 = vector.shape_cast %202 : vector<16x8xf32> to vector<2x8x8xf32>
    %204 = vector.extract_strided_slice %181 {offsets = [0, 80], sizes = [16, 8], strides = [1, 1]} : vector<16x128xf32> to vector<16x8xf32>
    %205 = vector.shape_cast %204 : vector<16x8xf32> to vector<2x8x8xf32>
    %206 = vector.extract_strided_slice %181 {offsets = [0, 88], sizes = [16, 8], strides = [1, 1]} : vector<16x128xf32> to vector<16x8xf32>
    %207 = vector.shape_cast %206 : vector<16x8xf32> to vector<2x8x8xf32>
    %208 = tpu.concatenate %201, %203, %205, %207 in 0 : vector<2x8x8xf32>, vector<2x8x8xf32>, vector<2x8x8xf32>, vector<2x8x8xf32> -> vector<8x8x8xf32>
    "tpu.trace_start"() <{level = 10 : i32, message = "bqd,bkd->bqk"}> : () -> ()
    %cst_53 = arith.constant dense<0.000000e+00> : vector<8x8x8xf32>
    %209 = tpu.matmul %190, %199, %cst_53 {dimension_numbers = #tpu.dot_dimension_numbers<[2], [2], [1], [1], [0, 0, 0, 1, 1, 1], [0], [0]>} : vector<8x8x8xf32>, vector<8x8x8xf32>, vector<8x8x8xf32> -> vector<8x8x8xf32>
    "tpu.trace_stop"() : () -> ()
    %cst_54 = arith.constant 0.353553385 : f32
    %210 = vector.broadcast %cst_54 : f32 to vector<8x8x8xf32>
    %211 = arith.mulf %209, %210 : vector<8x8x8xf32>
    %212 = vector.broadcast %41 : vector<8x1x8xf32> to vector<8x8x8xf32>
    %213 = arith.addf %211, %212 : vector<8x8x8xf32>
    %cst_55 = arith.constant dense<0xFF800000> : vector<8x8xf32>
    %214 = vector.multi_reduction <maximumf>, %213, %cst_55 [2] : vector<8x8x8xf32> to vector<8x8xf32>
    %215 = vector.shape_cast %214 : vector<8x8xf32> to vector<8x8x1xf32>
    %216 = vector.broadcast %215 : vector<8x8x1xf32> to vector<8x8x8xf32>
    %217 = arith.subf %213, %216 : vector<8x8x8xf32>
    %218 = math.exp %217 : vector<8x8x8xf32>
    %cst_56 = arith.constant dense<0.000000e+00> : vector<8x8xf32>
    %219 = vector.multi_reduction <add>, %218, %cst_56 [2] : vector<8x8x8xf32> to vector<8x8xf32>
    %220 = vector.shape_cast %219 : vector<8x8xf32> to vector<8x8x1xf32>
    %221 = tpu.reciprocal %220 {approx = true} : vector<8x8x1xf32> -> vector<8x8x1xf32>
    %222 = vector.broadcast %221 : vector<8x8x1xf32> to vector<8x8x8xf32>
    %223 = arith.mulf %218, %222 : vector<8x8x8xf32>
    "tpu.trace_start"() <{level = 10 : i32, message = "bqk,bkd->bqd"}> : () -> ()
    %cst_57 = arith.constant dense<0.000000e+00> : vector<8x8x8xf32>
    %224 = tpu.matmul %223, %208, %cst_57 {dimension_numbers = #tpu.dot_dimension_numbers<[2], [1], [1], [2], [0, 0, 0, 1, 1, 2], [0], [0]>} : vector<8x8x8xf32>, vector<8x8x8xf32>, vector<8x8x8xf32> -> vector<8x8x8xf32>
    "tpu.trace_stop"() : () -> ()
    %225 = vector.extract_strided_slice %224 {offsets = [0, 0, 0], sizes = [2, 8, 8], strides = [1, 1, 1]} : vector<8x8x8xf32> to vector<2x8x8xf32>
    %226 = vector.shape_cast %225 : vector<2x8x8xf32> to vector<16x8xf32>
    %227 = vector.extract_strided_slice %224 {offsets = [2, 0, 0], sizes = [2, 8, 8], strides = [1, 1, 1]} : vector<8x8x8xf32> to vector<2x8x8xf32>
    %228 = vector.shape_cast %227 : vector<2x8x8xf32> to vector<16x8xf32>
    %229 = vector.extract_strided_slice %224 {offsets = [4, 0, 0], sizes = [2, 8, 8], strides = [1, 1, 1]} : vector<8x8x8xf32> to vector<2x8x8xf32>
    %230 = vector.shape_cast %229 : vector<2x8x8xf32> to vector<16x8xf32>
    %231 = vector.extract_strided_slice %224 {offsets = [6, 0, 0], sizes = [2, 8, 8], strides = [1, 1, 1]} : vector<8x8x8xf32> to vector<2x8x8xf32>
    %232 = vector.shape_cast %231 : vector<2x8x8xf32> to vector<16x8xf32>
    %233 = tpu.concatenate %226, %228, %230, %232 in 1 : vector<16x8xf32>, vector<16x8xf32>, vector<16x8xf32>, vector<16x8xf32> -> vector<16x32xf32>
    %c360 = arith.constant 360 : index
    %c0_58 = arith.constant 0 : index
    %234 = vector.load %arg0[%c360, %c0_58] : memref<632x128xf32, #tpu.memory_space<vmem>>, vector<32x32xf32>
    %cst_59 = arith.constant dense<0.000000e+00> : vector<16x32xf32>
    %235 = tpu.matmul %233, %234, %cst_59 {dimension_numbers = #tpu.dot_dimension_numbers<[1], [0], [0], [1], [0, 0, 1, 1], [], []>} : vector<16x32xf32>, vector<32x32xf32>, vector<16x32xf32> -> vector<16x32xf32>
    %c392 = arith.constant 392 : index
    %c0_60 = arith.constant 0 : index
    %236 = vector.load %arg0[%c392, %c0_60] : memref<632x128xf32, #tpu.memory_space<vmem>>, vector<1x32xf32>
    %237 = vector.broadcast %236 : vector<1x32xf32> to vector<16x32xf32>
    %238 = arith.addf %235, %237 : vector<16x32xf32>
    %239 = arith.addf %238, %176 : vector<16x32xf32>
    %c400 = arith.constant 400 : index
    %c0_61 = arith.constant 0 : index
    %240 = vector.load %arg0[%c400, %c0_61] : memref<632x128xf32, #tpu.memory_space<vmem>>, vector<1x32xf32>
    %c408 = arith.constant 408 : index
    %c0_62 = arith.constant 0 : index
    %241 = vector.load %arg0[%c408, %c0_62] : memref<632x128xf32, #tpu.memory_space<vmem>>, vector<1x32xf32>
    %cst_63 = arith.constant dense<0.000000e+00> : vector<16xf32>
    %242 = vector.multi_reduction <add>, %239, %cst_63 [1] : vector<16x32xf32> to vector<16xf32>
    %243 = vector.shape_cast %242 : vector<16xf32> to vector<16x1xf32>
    %cst_64 = arith.constant 3.200000e+01 : f32
    %244 = vector.broadcast %cst_64 : f32 to vector<16x1xf32>
    %245 = arith.divf %243, %244 : vector<16x1xf32>
    %246 = arith.mulf %239, %239 : vector<16x32xf32>
    %cst_65 = arith.constant dense<0.000000e+00> : vector<16xf32>
    %247 = vector.multi_reduction <add>, %246, %cst_65 [1] : vector<16x32xf32> to vector<16xf32>
    %248 = vector.shape_cast %247 : vector<16xf32> to vector<16x1xf32>
    %cst_66 = arith.constant 3.200000e+01 : f32
    %249 = vector.broadcast %cst_66 : f32 to vector<16x1xf32>
    %250 = arith.divf %248, %249 : vector<16x1xf32>
    %251 = arith.mulf %245, %245 : vector<16x1xf32>
    %252 = arith.subf %250, %251 : vector<16x1xf32>
    %253 = vector.broadcast %245 : vector<16x1xf32> to vector<16x32xf32>
    %254 = arith.subf %239, %253 : vector<16x32xf32>
    %cst_67 = arith.constant 9.99999996E-13 : f32
    %255 = vector.broadcast %cst_67 : f32 to vector<16x1xf32>
    %256 = arith.addf %252, %255 : vector<16x1xf32>
    %257 = math.rsqrt %256 : vector<16x1xf32>
    %258 = vector.broadcast %257 : vector<16x1xf32> to vector<16x32xf32>
    %259 = arith.mulf %254, %258 : vector<16x32xf32>
    %260 = vector.broadcast %240 : vector<1x32xf32> to vector<16x32xf32>
    %261 = arith.mulf %259, %260 : vector<16x32xf32>
    %262 = vector.broadcast %241 : vector<1x32xf32> to vector<16x32xf32>
    %263 = arith.addf %261, %262 : vector<16x32xf32>
    %c416 = arith.constant 416 : index
    %c0_68 = arith.constant 0 : index
    %264 = vector.load %arg0[%c416, %c0_68] : memref<632x128xf32, #tpu.memory_space<vmem>>, vector<32x64xf32>
    %cst_69 = arith.constant dense<0.000000e+00> : vector<16x64xf32>
    %265 = tpu.matmul %263, %264, %cst_69 {dimension_numbers = #tpu.dot_dimension_numbers<[1], [0], [0], [1], [0, 0, 1, 1], [], []>} : vector<16x32xf32>, vector<32x64xf32>, vector<16x64xf32> -> vector<16x64xf32>
    %c448 = arith.constant 448 : index
    %c0_70 = arith.constant 0 : index
    %266 = vector.load %arg0[%c448, %c0_70] : memref<632x128xf32, #tpu.memory_space<vmem>>, vector<1x64xf32>
    %267 = vector.broadcast %266 : vector<1x64xf32> to vector<16x64xf32>
    %268 = arith.addf %265, %267 : vector<16x64xf32>
    %cst_71 = arith.constant 5.000000e-01 : f32
    %269 = vector.broadcast %cst_71 : f32 to vector<16x64xf32>
    %270 = arith.mulf %269, %268 : vector<16x64xf32>
    %cst_72 = arith.constant 4.471500e-02 : f32
    %271 = vector.broadcast %cst_72 : f32 to vector<16x64xf32>
    %272 = arith.mulf %271, %268 : vector<16x64xf32>
    %273 = arith.mulf %272, %268 : vector<16x64xf32>
    %274 = arith.mulf %273, %268 : vector<16x64xf32>
    %275 = arith.addf %268, %274 : vector<16x64xf32>
    %cst_73 = arith.constant 0.797884583 : f32
    %276 = vector.broadcast %cst_73 : f32 to vector<16x64xf32>
    %277 = arith.mulf %276, %275 : vector<16x64xf32>
    %278 = math.tanh %277 : vector<16x64xf32>
    %cst_74 = arith.constant 1.000000e+00 : f32
    %279 = vector.broadcast %cst_74 : f32 to vector<16x64xf32>
    %280 = arith.addf %279, %278 : vector<16x64xf32>
    %281 = arith.mulf %270, %280 : vector<16x64xf32>
    %c456 = arith.constant 456 : index
    %c0_75 = arith.constant 0 : index
    %282 = vector.load %arg0[%c456, %c0_75] : memref<632x128xf32, #tpu.memory_space<vmem>>, vector<64x32xf32>
    %cst_76 = arith.constant dense<0.000000e+00> : vector<16x32xf32>
    %283 = tpu.matmul %281, %282, %cst_76 {dimension_numbers = #tpu.dot_dimension_numbers<[1], [0], [0], [1], [0, 0, 1, 1], [], []>} : vector<16x64xf32>, vector<64x32xf32>, vector<16x32xf32> -> vector<16x32xf32>
    %c520 = arith.constant 520 : index
    %c0_77 = arith.constant 0 : index
    %284 = vector.load %arg0[%c520, %c0_77] : memref<632x128xf32, #tpu.memory_space<vmem>>, vector<1x32xf32>
    %285 = vector.broadcast %284 : vector<1x32xf32> to vector<16x32xf32>
    %286 = arith.addf %283, %285 : vector<16x32xf32>
    %287 = arith.addf %286, %263 : vector<16x32xf32>
    %c528 = arith.constant 528 : index
    %c0_78 = arith.constant 0 : index
    %288 = vector.load %arg0[%c528, %c0_78] : memref<632x128xf32, #tpu.memory_space<vmem>>, vector<1x32xf32>
    %c536 = arith.constant 536 : index
    %c0_79 = arith.constant 0 : index
    %289 = vector.load %arg0[%c536, %c0_79] : memref<632x128xf32, #tpu.memory_space<vmem>>, vector<1x32xf32>
    %cst_80 = arith.constant dense<0.000000e+00> : vector<16xf32>
    %290 = vector.multi_reduction <add>, %287, %cst_80 [1] : vector<16x32xf32> to vector<16xf32>
    %291 = vector.shape_cast %290 : vector<16xf32> to vector<16x1xf32>
    %cst_81 = arith.constant 3.200000e+01 : f32
    %292 = vector.broadcast %cst_81 : f32 to vector<16x1xf32>
    %293 = arith.divf %291, %292 : vector<16x1xf32>
    %294 = arith.mulf %287, %287 : vector<16x32xf32>
    %cst_82 = arith.constant dense<0.000000e+00> : vector<16xf32>
    %295 = vector.multi_reduction <add>, %294, %cst_82 [1] : vector<16x32xf32> to vector<16xf32>
    %296 = vector.shape_cast %295 : vector<16xf32> to vector<16x1xf32>
    %cst_83 = arith.constant 3.200000e+01 : f32
    %297 = vector.broadcast %cst_83 : f32 to vector<16x1xf32>
    %298 = arith.divf %296, %297 : vector<16x1xf32>
    %299 = arith.mulf %293, %293 : vector<16x1xf32>
    %300 = arith.subf %298, %299 : vector<16x1xf32>
    %301 = vector.broadcast %293 : vector<16x1xf32> to vector<16x32xf32>
    %302 = arith.subf %287, %301 : vector<16x32xf32>
    %cst_84 = arith.constant 9.99999996E-13 : f32
    %303 = vector.broadcast %cst_84 : f32 to vector<16x1xf32>
    %304 = arith.addf %300, %303 : vector<16x1xf32>
    %305 = math.rsqrt %304 : vector<16x1xf32>
    %306 = vector.broadcast %305 : vector<16x1xf32> to vector<16x32xf32>
    %307 = arith.mulf %302, %306 : vector<16x32xf32>
    %308 = vector.broadcast %288 : vector<1x32xf32> to vector<16x32xf32>
    %309 = arith.mulf %307, %308 : vector<16x32xf32>
    %310 = vector.broadcast %289 : vector<1x32xf32> to vector<16x32xf32>
    %311 = arith.addf %309, %310 : vector<16x32xf32>
    %c624 = arith.constant 624 : index
    %c0_85 = arith.constant 0 : index
    %312 = vector.load %arg0[%c624, %c0_85] : memref<632x128xf32, #tpu.memory_space<vmem>>, vector<2x16xf32>
    %cst_86 = arith.constant dense<0.000000e+00> : vector<2x32xf32>
    %313 = tpu.matmul %312, %311, %cst_86 {dimension_numbers = #tpu.dot_dimension_numbers<[1], [0], [0], [1], [0, 0, 1, 1], [], []>} : vector<2x16xf32>, vector<16x32xf32>, vector<2x32xf32> -> vector<2x32xf32>
    %c544 = arith.constant 544 : index
    %c0_87 = arith.constant 0 : index
    %314 = vector.load %arg0[%c544, %c0_87] : memref<632x128xf32, #tpu.memory_space<vmem>>, vector<32x32xf32>
    %cst_88 = arith.constant dense<0.000000e+00> : vector<2x32xf32>
    %315 = tpu.matmul %313, %314, %cst_88 {dimension_numbers = #tpu.dot_dimension_numbers<[1], [0], [0], [1], [0, 0, 1, 1], [], []>} : vector<2x32xf32>, vector<32x32xf32>, vector<2x32xf32> -> vector<2x32xf32>
    %c576 = arith.constant 576 : index
    %c0_89 = arith.constant 0 : index
    %316 = vector.load %arg0[%c576, %c0_89] : memref<632x128xf32, #tpu.memory_space<vmem>>, vector<1x32xf32>
    %317 = vector.broadcast %316 : vector<1x32xf32> to vector<2x32xf32>
    %318 = arith.addf %315, %317 : vector<2x32xf32>
    %319 = math.tanh %318 : vector<2x32xf32>
    %c584 = arith.constant 584 : index
    %c0_90 = arith.constant 0 : index
    %320 = vector.load %arg0[%c584, %c0_90] : memref<632x128xf32, #tpu.memory_space<vmem>>, vector<32x128xf32>
    %cst_91 = arith.constant dense<0.000000e+00> : vector<2x128xf32>
    %321 = tpu.matmul %319, %320, %cst_91 {dimension_numbers = #tpu.dot_dimension_numbers<[1], [0], [0], [1], [0, 0, 1, 1], [], []>} : vector<2x32xf32>, vector<32x128xf32>, vector<2x128xf32> -> vector<2x128xf32>
    %c616 = arith.constant 616 : index
    %c0_92 = arith.constant 0 : index
    %322 = vector.load %arg0[%c616, %c0_92] : memref<632x128xf32, #tpu.memory_space<vmem>>, vector<1x128xf32>
    %323 = vector.broadcast %322 : vector<1x128xf32> to vector<2x128xf32>
    %324 = arith.addf %321, %323 : vector<2x128xf32>
    %c0_93 = arith.constant 0 : index
    %c0_94 = arith.constant 0 : index
    %325 = vector.load %arg3[%c0_93, %c0_94] : memref<2x128xf32, #tpu.memory_space<vmem>>, vector<2x128xf32>
    tpu.vector_store %arg3[%c0_93, %c0_94], %324 {strides = array<i32>} : memref<2x128xf32, #tpu.memory_space<vmem>>, vector<2x128xf32>,
    return
  }
}

</mosaic_0001>

<llo_original>
// kernel: fwd.1
$region0: #{fwd.1}
  #allocation0 [shape = 'u32[]', space=smem, size = 0x4, offset = 0x4, fixed_abs, tag = 'smem constant byte address 0x4 - core index']
  #allocation1 [shape = 'u32[72,128]{1,0:T(1,128)}', space=vmem, size = 0x9000, scoped, tag = 'internal scratch']
  %s0 = inlined_call_operand.hbm [shape: f32[632,128], index: 0, kind: input, shape index: {}]
  %s1 = inlined_call_operand.vmem [shape: s32[16,1], index: 1, kind: input, shape index: {}]
  %s2 = inlined_call_operand.vmem [shape: s32[2,8], index: 2, kind: input, shape index: {}]
  %s3 = inlined_call_operand.hbm [shape: f32[2,128], index: 3, kind: output, shape index: {}]
  %s4 = sld [smem:[#allocation0]]
  $region26: #{fwd.1} parent=0
    _
  %s6 = ssub.s32 1, %s4
  %s7 = scalar_select 0, %s6, %s4
  $region1: #{fwd.1} parent=0
    #allocation2 [shape = 'u8[323584]{0}', space=vmem, size = 0x4f000, scoped, tag = 'input window, operand 0, single buffered']
    #allocation3 [shape = 's32[1]{0}', space=sflag, size = 0x4, scoped, tag = 'scoped memory for fwd.1']
    #allocation4 [shape = 's32[1]{0}', space=sflag, size = 0x4, scoped, tag = 'scoped memory for fwd.1']
    #allocation5 [shape = 'u8[1024]{0}', space=vmem, size = 0x400, scoped, tag = 'output window, operand 0, single buffered']
    %8 = vsyncpa [#allocation3], 0
    %9 = vsyncpa [#allocation4], 0
    // Predicated region
    $region2: #{fwd.1} parent=1 // pred_check
      _
    $region3: #{fwd.1} parent=1 // pred_check_branch
      %11 = sbr.rel (0) target = $region5
    $region4: #{fwd.1} parent=1 // pred_region
      %13 = vsyncadd [#allocation3], 0
      %s14 = sshll.u32 %s0, 4
      %s15 = int_to_ptr.hbm [resolvable:$true] %s14
      %s16 = sshll.u32 [#allocation2], 4
      %s17 = int_to_ptr.vmem [resolvable:$true] %s16
      %22 = dma.hbm_to_vmem [thread:$0]  %s15, 10112, %s17, [#allocation3], 128, 128, 8
    $region5: #{fwd.1} parent=1 // pred_fallthru
      _
    // Predicated region
    $region6: #{fwd.1} parent=1 // pred_check
      _
    $region7: #{fwd.1} parent=1 // pred_check_branch
      %24 = sbr.rel (0) target = $region9
    $region8: #{fwd.1} parent=1 // pred_region
      _
    $region9: #{fwd.1} parent=1 // pred_fallthru
      _
    // Predicated region
    $region10: #{fwd.1} parent=1 // pred_check
      _
    $region11: #{fwd.1} parent=1 // pred_check_branch
      %26 = sbr.rel (0) target = $region13
    $region12: #{fwd.1} parent=1 // pred_region
      _
    $region13: #{fwd.1} parent=1 // pred_fallthru
      _
    // Predicated region
    $region14: #{fwd.1} parent=1 // pred_check
      _
    $region15: #{fwd.1} parent=1 // pred_check_branch
      %28 = sbr.rel (0) target = $region17
    $region16: #{fwd.1} parent=1 // pred_region
      %30 = dma.done [#allocation3], 10112
    $region17: #{fwd.1} parent=1 // pred_fallthru
      _
    %v31 = vld [vmem:[%s1] sm:$0xff]
    %v32 = vld [vmem:[%s1 + $0x8] sm:$0xff]
    %v33 = vlaneseq
    %v34 = vand.u32 %v33, 127
    %35 = vset.pattern.permute.xlu0 0
    %36 = vperm.xlu0 %35, %v31
    %v37 = vpop.permute.xlu0 %36
    %38 = vset.pattern.permute.xlu0 0
    %39 = vperm.xlu0 %38, %v32
    %v40 = vpop.permute.xlu0 %39
    %vm41 = vcmp.eq.s32.totalorder %v34, %v37
    %vm42 = vcmp.eq.s32.totalorder %v34, %v40
    %v43 = vsel %vm41, 1, 0
    %v44 = vsel %vm42, 1, 0
    %v45 = vcvt.s32.f32 %v43
    %v46 = vcvt.s32.f32 %v44
    %v47 = vld [vmem:[#allocation2] sm:$0xff]
    %v48 = vld [vmem:[#allocation2 + $0x8] sm:$0xff]
    %v49 = vld [vmem:[#allocation2 + $0x10] sm:$0xff]
    %v50 = vld [vmem:[#allocation2 + $0x18] sm:$0xff]
    %v51 = vld [vmem:[#allocation2 + $0x20] sm:$0xff]
    %v52 = vld [vmem:[#allocation2 + $0x28] sm:$0xff]
    %v53 = vld [vmem:[#allocation2 + $0x30] sm:$0xff]
    %v54 = vld [vmem:[#allocation2 + $0x38] sm:$0xff]
    %v55 = vld [vmem:[#allocation2 + $0x40] sm:$0xff]
    %v56 = vld [vmem:[#allocation2 + $0x48] sm:$0xff]
    %vm57 = vcmask 523264
    %v59 = vsel %vm57, %v45, 0
    %v62 = vsel %vm57, %v46, 0
    %64 = vmatpush.msra.mxu0 0.0
    %65 = vmatpush.msra.mxu0 0.0
    %66 = vmatpush.msra.mxu0 0.0
    %67 = vmatpush.msra.mxu0 0.0
    %68 = vmatpush.msra.mxu0 0.0
    %69 = vmatpush.msra.mxu0 0.0
    %70 = vmatpush.msra.mxu0 0.0
    %71 = vmatpush.msra.mxu0 0.0
    %72 = vmatpush.msra.mxu0 %v54
    %73 = vmatpush.msra.mxu0 %v53
    %74 = vmatpush.msra.mxu0 %v52
    %75 = vmatpush.msra.mxu0 %v51
    %76 = vmatpush.msra.mxu0 %v50
    %77 = vmatpush.msra.mxu0 %v49
    %78 = vmatpush.msra.mxu0 %v48
    %79 = vmatpush.msra.mxu0 %v47
    %80 = vmatmul.f32.gmra.mxu0 %v59
    %v81 = vpop.f32.mrf.mxu0
    %v82 = vadd.f32 %v55, %v81
    %83 = vmatmul.f32.gmra.mxu0 %v62
    %v84 = vpop.f32.mrf.mxu0
    %v85 = vadd.f32 %v56, %v84
    %86 = vdwg.mxu0
    %v87 = vld [vmem:[#allocation2 + $0x50] sm:$0x1]
    %v88 = vld [vmem:[#allocation2 + $0x58] sm:$0x1]
    %vm89 = vcmask 261120
    %v90 = vsel %vm89, %v82, 0.0
    %91 = vadd.xlane.f32.xlu0 %v90
    %v92 = vpop.xlane.xlu0 %91
    %v93 = vsel %vm89, %v85, 0.0
    %94 = vadd.xlane.f32.xlu0 %v93
    %v95 = vpop.xlane.xlu0 %94
    %v96 = vrcp.pop 32.0
    %v97 = vmul.f32 32.0, %v96
    %v98 = vsub.f32 1.0, %v97
    %v99 = vmul.f32 %v96, %v98
    %v100 = vadd.f32 %v96, %v99
    %vm101 = vweird.f32 %v96
    %v102 = vsel %vm101, %v96, %v100
    %v103 = vmul.f32 %v92, %v102
    %v104 = vmul.f32 %v95, %v102
    %v105 = vmul.f32 %v82, %v82
    %v106 = vmul.f32 %v85, %v85
    %v107 = vsel %vm89, %v105, 0.0
    %108 = vadd.xlane.f32.xlu0 %v107
    %v109 = vpop.xlane.xlu0 %108
    %v110 = vsel %vm89, %v106, 0.0
    %111 = vadd.xlane.f32.xlu0 %v110
    %v112 = vpop.xlane.xlu0 %111
    %v113 = vmul.f32 %v109, %v102
    %v114 = vmul.f32 %v112, %v102
    %v115 = vmul.f32 %v103, %v103
    %v116 = vmul.f32 %v104, %v104
    %v117 = vsub.f32 %v113, %v115
    %v118 = vsub.f32 %v114, %v116
    %v119 = vsub.f32 %v82, %v103
    %v120 = vsub.f32 %v85, %v104
    %v121 = vadd.f32 %v117, 1e-12
    %v122 = vadd.f32 %v118, 1e-12
    %v123 = vrsqrt.pop %v121
    %v124 = vmul.f32 %v123, %v121
    %v125 = vmul.f32 %v124, %v123
    %v126 = vmul.f32 0.5, %v125
    %v127 = vsub.f32 1.5, %v126
    %v128 = vmul.f32 %v123, %v127
    %vm129 = vweird.f32 %v121
    %vm130 = vweird.f32 %v123
    %vm131 = vmor %vm129, %vm130
    %v132 = vsel %vm131, %v123, %v128
    %v133 = vrsqrt.pop %v122
    %v134 = vmul.f32 %v133, %v122
    %v135 = vmul.f32 %v134, %v133
    %v136 = vmul.f32 0.5, %v135
    %v137 = vsub.f32 1.5, %v136
    %v138 = vmul.f32 %v133, %v137
    %vm139 = vweird.f32 %v122
    %vm140 = vweird.f32 %v133
    %vm141 = vmor %vm139, %vm140
    %v142 = vsel %vm141, %v133, %v138
    %v143 = vmul.f32 %v119, %v132
    %v144 = vmul.f32 %v120, %v142
    %v145 = vperm.slane %v87, 0
    %v146 = vmul.f32 %v143, %v145
    %v147 = vmul.f32 %v144, %v145
    %v148 = vperm.slane %v88, 0
    %v149 = vadd.f32 %v146, %v148
    %v150 = vadd.f32 %v147, %v148
    %v151 = vld [vmem:[%s2] sm:$0x3]
    %v152 = vcvt.s32.f32 %v151
    %v153 = vsub.f32 1.0, %v152
    %v154 = vmul.f32 %v153, -10000.0
    %v156 = vrot.slane %v154, 6
    %v158 = vrot.slane %v154, 4
    %v160 = vrot.slane %v154, 2
    %vm162 = vcmask 1041408
    %v163 = vsel %vm162, %v154, %v156
    %vm164 = vcmask 1043456
    %v165 = vsel %vm164, %v163, %v158
    %vm166 = vcmask 1045504
    %v167 = vsel %vm166, %v165, %v160
    %v169 = vrot.slane %v167, 1
    %v170 = vrot.slane %v167, 2
    %v171 = vrot.slane %v167, 3
    %v172 = vrot.slane %v167, 4
    %v173 = vrot.slane %v167, 5
    %v174 = vrot.slane %v167, 6
    %v175 = vrot.slane %v167, 7
    %v176 = vld [vmem:[#allocation2 + $0x60] sm:$0xff]
    %v177 = vld [vmem:[#allocation2 + $0x68] sm:$0xff]
    %v178 = vld [vmem:[#allocation2 + $0x70] sm:$0xff]
    %v179 = vld [vmem:[#allocation2 + $0x78] sm:$0xff]
    %v180 = vld [vmem:[#allocation2 + $0x80] sm:$0x1]
    %v181 = vperm.slane %v180, 0
    %v183 = vsel %vm89, %v149, 0
    %v186 = vsel %vm89, %v150, 0
    %188 = vmatpush.msra.mxu0 0.0
    %189 = vmatpush.msra.mxu0 0.0
    %190 = vmatpush.msra.mxu0 0.0
    %191 = vmatpush.msra.mxu0 0.0
    %192 = vmatpush.msra.mxu0 0.0
    %193 = vmatpush.msra.mxu0 0.0
    %194 = vmatpush.msra.mxu0 0.0
    %195 = vmatpush.msra.mxu0 0.0
    %196 = vmatpush.msra.mxu0 0.0
    %197 = vmatpush.msra.mxu0 0.0
    %198 = vmatpush.msra.mxu0 0.0
    %199 = vmatpush.msra.mxu0 0.0
    %200 = vmatpush.msra.mxu0 %v179
    %201 = vmatpush.msra.mxu0 %v178
    %202 = vmatpush.msra.mxu0 %v177
    %203 = vmatpush.msra.mxu0 %v176
    %204 = vmatmul.f32.gmra.mxu0 %v183
    %v205 = vpop.f32.mrf.mxu0
    %v206 = vadd.f32 %v181, %v205
    %207 = vmatmul.f32.gmra.mxu0 %v186
    %v208 = vpop.f32.mrf.mxu0
    %v209 = vadd.f32 %v181, %v208
    %210 = vdwg.mxu0
    %213 = vrot.lane.b32.xlu0 %v206, 120
    %v214 = vpop.permute.xlu0 %213
    %215 = vrot.lane.b32.xlu0 %v209, 120
    %v216 = vpop.permute.xlu0 %215
    %217 = vrot.lane.b32.xlu0 %v206, 112
    %v218 = vpop.permute.xlu0 %217
    %219 = vrot.lane.b32.xlu0 %v209, 112
    %v220 = vpop.permute.xlu0 %219
    %221 = vrot.lane.b32.xlu0 %v206, 104
    %v222 = vpop.permute.xlu0 %221
    %223 = vrot.lane.b32.xlu0 %v209, 104
    %v224 = vpop.permute.xlu0 %223
    %225 = vrot.lane.b32.xlu0 %v206, 96
    %v226 = vpop.permute.xlu0 %225
    %vm227 = vcmask 64512
    %v228 = vsel %vm227, %v206, 0
    %v230 = vsel %vm227, %v226, 0
    %232 = vmatpush.xpose.msra.mxu0 0.0
    %233 = vmatpush.xpose.msra.mxu0 0.0
    %234 = vmatpush.xpose.msra.mxu0 0.0
    %235 = vmatpush.xpose.msra.mxu0 0.0
    %236 = vmatpush.xpose.msra.mxu0 0.0
    %237 = vmatpush.xpose.msra.mxu0 0.0
    %238 = vmatpush.xpose.msra.mxu0 0.0
    %239 = vmatpush.xpose.msra.mxu0 0.0
    %240 = vmatpush.xpose.msra.mxu0 0.0
    %241 = vmatpush.xpose.msra.mxu0 0.0
    %242 = vmatpush.xpose.msra.mxu0 0.0
    %243 = vmatpush.xpose.msra.mxu0 0.0
    %244 = vmatpush.xpose.msra.mxu0 0.0
    %245 = vmatpush.xpose.msra.mxu0 0.0
    %246 = vmatpush.xpose.msra.mxu0 0.0
    %247 = vmatpush.xpose.msra.mxu0 %v230
    %248 = vmatmul.f32.gmra.mxu0 %v228
    %v249 = vpop.f32.mrf.mxu0
    %v250 = vadd.f32 0.0, %v249
    %251 = vdwg.mxu0
    %252 = vrot.lane.b32.xlu0 %v209, 96
    %v253 = vpop.permute.xlu0 %252
    %v254 = vsel %vm227, %v209, 0
    %v256 = vsel %vm227, %v253, 0
    %258 = vmatpush.xpose.msra.mxu0 0.0
    %259 = vmatpush.xpose.msra.mxu0 0.0
    %260 = vmatpush.xpose.msra.mxu0 0.0
    %261 = vmatpush.xpose.msra.mxu0 0.0
    %262 = vmatpush.xpose.msra.mxu0 0.0
    %263 = vmatpush.xpose.msra.mxu0 0.0
    %264 = vmatpush.xpose.msra.mxu0 0.0
    %265 = vmatpush.xpose.msra.mxu0 0.0
    %266 = vmatpush.xpose.msra.mxu0 0.0
    %267 = vmatpush.xpose.msra.mxu0 0.0
    %268 = vmatpush.xpose.msra.mxu0 0.0
    %269 = vmatpush.xpose.msra.mxu0 0.0
    %270 = vmatpush.xpose.msra.mxu0 0.0
    %271 = vmatpush.xpose.msra.mxu0 0.0
    %272 = vmatpush.xpose.msra.mxu0 0.0
    %273 = vmatpush.xpose.msra.mxu0 %v256
    %274 = vmatmul.f32.gmra.mxu0 %v254
    %v275 = vpop.f32.mrf.mxu0
    %v276 = vadd.f32 0.0, %v275
    %277 = vdwg.mxu0
    %278 = vrot.lane.b32.xlu0 %v214, 96
    %v279 = vpop.permute.xlu0 %278
    %v280 = vsel %vm227, %v214, 0
    %v282 = vsel %vm227, %v279, 0
    %284 = vmatpush.xpose.msra.mxu0 0.0
    %285 = vmatpush.xpose.msra.mxu0 0.0
    %286 = vmatpush.xpose.msra.mxu0 0.0
    %287 = vmatpush.xpose.msra.mxu0 0.0
    %288 = vmatpush.xpose.msra.mxu0 0.0
    %289 = vmatpush.xpose.msra.mxu0 0.0
    %290 = vmatpush.xpose.msra.mxu0 0.0
    %291 = vmatpush.xpose.msra.mxu0 0.0
    %292 = vmatpush.xpose.msra.mxu0 0.0
    %293 = vmatpush.xpose.msra.mxu0 0.0
    %294 = vmatpush.xpose.msra.mxu0 0.0
    %295 = vmatpush.xpose.msra.mxu0 0.0
    %296 = vmatpush.xpose.msra.mxu0 0.0
    %297 = vmatpush.xpose.msra.mxu0 0.0
    %298 = vmatpush.xpose.msra.mxu0 0.0
    %299 = vmatpush.xpose.msra.mxu0 %v282
    %300 = vmatmul.f32.gmra.mxu0 %v280
    %v301 = vpop.f32.mrf.mxu0
    %v302 = vadd.f32 0.0, %v301
    %303 = vdwg.mxu0
    %304 = vrot.lane.b32.xlu0 %v216, 96
    %v305 = vpop.permute.xlu0 %304
    %v306 = vsel %vm227, %v216, 0
    %v308 = vsel %vm227, %v305, 0
    %310 = vmatpush.xpose.msra.mxu0 0.0
    %311 = vmatpush.xpose.msra.mxu0 0.0
    %312 = vmatpush.xpose.msra.mxu0 0.0
    %313 = vmatpush.xpose.msra.mxu0 0.0
    %314 = vmatpush.xpose.msra.mxu0 0.0
    %315 = vmatpush.xpose.msra.mxu0 0.0
    %316 = vmatpush.xpose.msra.mxu0 0.0
    %317 = vmatpush.xpose.msra.mxu0 0.0
    %318 = vmatpush.xpose.msra.mxu0 0.0
    %319 = vmatpush.xpose.msra.mxu0 0.0
    %320 = vmatpush.xpose.msra.mxu0 0.0
    %321 = vmatpush.xpose.msra.mxu0 0.0
    %322 = vmatpush.xpose.msra.mxu0 0.0
    %323 = vmatpush.xpose.msra.mxu0 0.0
    %324 = vmatpush.xpose.msra.mxu0 0.0
    %325 = vmatpush.xpose.msra.mxu0 %v308
    %326 = vmatmul.f32.gmra.mxu0 %v306
    %v327 = vpop.f32.mrf.mxu0
    %v328 = vadd.f32 0.0, %v327
    %329 = vdwg.mxu0
    %330 = vrot.lane.b32.xlu0 %v218, 96
    %v331 = vpop.permute.xlu0 %330
    %v332 = vsel %vm227, %v218, 0
    %v334 = vsel %vm227, %v331, 0
    %336 = vmatpush.xpose.msra.mxu0 0.0
    %337 = vmatpush.xpose.msra.mxu0 0.0
    %338 = vmatpush.xpose.msra.mxu0 0.0
    %339 = vmatpush.xpose.msra.mxu0 0.0
    %340 = vmatpush.xpose.msra.mxu0 0.0
    %341 = vmatpush.xpose.msra.mxu0 0.0
    %342 = vmatpush.xpose.msra.mxu0 0.0
    %343 = vmatpush.xpose.msra.mxu0 0.0
    %344 = vmatpush.xpose.msra.mxu0 0.0
    %345 = vmatpush.xpose.msra.mxu0 0.0
    %346 = vmatpush.xpose.msra.mxu0 0.0
    %347 = vmatpush.xpose.msra.mxu0 0.0
    %348 = vmatpush.xpose.msra.mxu0 0.0
    %349 = vmatpush.xpose.msra.mxu0 0.0
    %350 = vmatpush.xpose.msra.mxu0 0.0
    %351 = vmatpush.xpose.msra.mxu0 %v334
    %352 = vmatmul.f32.gmra.mxu0 %v332
    %v353 = vpop.f32.mrf.mxu0
    %v354 = vadd.f32 0.0, %v353
    %355 = vdwg.mxu0
    %356 = vrot.lane.b32.xlu0 %v220, 96
    %v357 = vpop.permute.xlu0 %356
    %v358 = vsel %vm227, %v220, 0
    %v360 = vsel %vm227, %v357, 0
    %362 = vmatpush.xpose.msra.mxu0 0.0
    %363 = vmatpush.xpose.msra.mxu0 0.0
    %364 = vmatpush.xpose.msra.mxu0 0.0
    %365 = vmatpush.xpose.msra.mxu0 0.0
    %366 = vmatpush.xpose.msra.mxu0 0.0
    %367 = vmatpush.xpose.msra.mxu0 0.0
    %368 = vmatpush.xpose.msra.mxu0 0.0
    %369 = vmatpush.xpose.msra.mxu0 0.0
    %370 = vmatpush.xpose.msra.mxu0 0.0
    %371 = vmatpush.xpose.msra.mxu0 0.0
    %372 = vmatpush.xpose.msra.mxu0 0.0
    %373 = vmatpush.xpose.msra.mxu0 0.0
    %374 = vmatpush.xpose.msra.mxu0 0.0
    %375 = vmatpush.xpose.msra.mxu0 0.0
    %376 = vmatpush.xpose.msra.mxu0 0.0
    %377 = vmatpush.xpose.msra.mxu0 %v360
    %378 = vmatmul.f32.gmra.mxu0 %v358
    %v379 = vpop.f32.mrf.mxu0
    %v380 = vadd.f32 0.0, %v379
    %381 = vdwg.mxu0
    %382 = vrot.lane.b32.xlu0 %v222, 96
    %v383 = vpop.permute.xlu0 %382
    %v384 = vsel %vm227, %v222, 0
    %v386 = vsel %vm227, %v383, 0
    %388 = vmatpush.xpose.msra.mxu0 0.0
    %389 = vmatpush.xpose.msra.mxu0 0.0
    %390 = vmatpush.xpose.msra.mxu0 0.0
    %391 = vmatpush.xpose.msra.mxu0 0.0
    %392 = vmatpush.xpose.msra.mxu0 0.0
    %393 = vmatpush.xpose.msra.mxu0 0.0
    %394 = vmatpush.xpose.msra.mxu0 0.0
    %395 = vmatpush.xpose.msra.mxu0 0.0
    %396 = vmatpush.xpose.msra.mxu0 0.0
    %397 = vmatpush.xpose.msra.mxu0 0.0
    %398 = vmatpush.xpose.msra.mxu0 0.0
    %399 = vmatpush.xpose.msra.mxu0 0.0
    %400 = vmatpush.xpose.msra.mxu0 0.0
    %401 = vmatpush.xpose.msra.mxu0 0.0
    %402 = vmatpush.xpose.msra.mxu0 0.0
    %403 = vmatpush.xpose.msra.mxu0 %v386
    %404 = vmatmul.f32.gmra.mxu0 %v384
    %v405 = vpop.f32.mrf.mxu0
    %v406 = vadd.f32 0.0, %v405
    %407 = vdwg.mxu0
    %408 = vrot.lane.b32.xlu0 %v224, 96
    %v409 = vpop.permute.xlu0 %408
    %v410 = vsel %vm227, %v224, 0
    %v412 = vsel %vm227, %v409, 0
    %414 = vmatpush.xpose.msra.mxu0 0.0
    %415 = vmatpush.xpose.msra.mxu0 0.0
    %416 = vmatpush.xpose.msra.mxu0 0.0
    %417 = vmatpush.xpose.msra.mxu0 0.0
    %418 = vmatpush.xpose.msra.mxu0 0.0
    %419 = vmatpush.xpose.msra.mxu0 0.0
    %420 = vmatpush.xpose.msra.mxu0 0.0
    %421 = vmatpush.xpose.msra.mxu0 0.0
    %422 = vmatpush.xpose.msra.mxu0 0.0
    %423 = vmatpush.xpose.msra.mxu0 0.0
    %424 = vmatpush.xpose.msra.mxu0 0.0
    %425 = vmatpush.xpose.msra.mxu0 0.0
    %426 = vmatpush.xpose.msra.mxu0 0.0
    %427 = vmatpush.xpose.msra.mxu0 0.0
    %428 = vmatpush.xpose.msra.mxu0 0.0
    %429 = vmatpush.xpose.msra.mxu0 %v412
    %430 = vmatmul.f32.gmra.mxu0 %v410
    %v431 = vpop.f32.mrf.mxu0
    %v432 = vadd.f32 0.0, %v431
    %433 = vdwg.mxu0
    %v434 = vmul.f32 %v250, 0.35355338
    %v435 = vmul.f32 %v276, 0.35355338
    %v436 = vmul.f32 %v302, 0.35355338
    %v437 = vmul.f32 %v328, 0.35355338
    %v438 = vmul.f32 %v354, 0.35355338
    %v439 = vmul.f32 %v380, 0.35355338
    %v440 = vmul.f32 %v406, 0.35355338
    %v441 = vmul.f32 %v432, 0.35355338
    %v442 = vperm.slane %v167, 0
    %v443 = vperm.slane %v169, 0
    %v444 = vperm.slane %v170, 0
    %v445 = vperm.slane %v171, 0
    %v446 = vperm.slane %v172, 0
    %v447 = vperm.slane %v173, 0
    %v448 = vperm.slane %v174, 0
    %v449 = vperm.slane %v175, 0
    %v458 = vadd.f32 %v434, %v442
    %v459 = vadd.f32 %v435, %v443
    %v460 = vadd.f32 %v436, %v444
    %v461 = vadd.f32 %v437, %v445
    %v462 = vadd.f32 %v438, %v446
    %v463 = vadd.f32 %v439, %v447
    %v464 = vadd.f32 %v440, %v448
    %v465 = vadd.f32 %v441, %v449
    %v466 = vsel %vm227, %v458, -inf
    %467 = vmax.xlane.f32.xlu0 %v466
    %v468 = vpop.xlane.xlu0 %467
    %v469 = vsel %vm227, %v459, -inf
    %470 = vmax.xlane.f32.xlu0 %v469
    %v471 = vpop.xlane.xlu0 %470
    %v472 = vsel %vm227, %v460, -inf
    %473 = vmax.xlane.f32.xlu0 %v472
    %v474 = vpop.xlane.xlu0 %473
    %v475 = vsel %vm227, %v461, -inf
    %476 = vmax.xlane.f32.xlu0 %v475
    %v477 = vpop.xlane.xlu0 %476
    %v478 = vsel %vm227, %v462, -inf
    %479 = vmax.xlane.f32.xlu0 %v478
    %v480 = vpop.xlane.xlu0 %479
    %v481 = vsel %vm227, %v463, -inf
    %482 = vmax.xlane.f32.xlu0 %v481
    %v483 = vpop.xlane.xlu0 %482
    %v484 = vsel %vm227, %v464, -inf
    %485 = vmax.xlane.f32.xlu0 %v484
    %v486 = vpop.xlane.xlu0 %485
    %v487 = vsel %vm227, %v465, -inf
    %488 = vmax.xlane.f32.xlu0 %v487
    %v489 = vpop.xlane.xlu0 %488
    %v490 = vsub.f32 %v458, %v468
    %v491 = vsub.f32 %v459, %v471
    %v492 = vsub.f32 %v460, %v474
    %v493 = vsub.f32 %v461, %v477
    %v494 = vsub.f32 %v462, %v480
    %v495 = vsub.f32 %v463, %v483
    %v496 = vsub.f32 %v464, %v486
    %v497 = vsub.f32 %v465, %v489
    %v498 = vmul.f32 %v490, 1.442695
    %v499 = vpow.pop %v498
    %v500 = vmul.f32 %v491, 1.442695
    %v501 = vpow.pop %v500
    %v502 = vmul.f32 %v492, 1.442695
    %v503 = vpow.pop %v502
    %v504 = vmul.f32 %v493, 1.442695
    %v505 = vpow.pop %v504
    %v506 = vmul.f32 %v494, 1.442695
    %v507 = vpow.pop %v506
    %v508 = vmul.f32 %v495, 1.442695
    %v509 = vpow.pop %v508
    %v510 = vmul.f32 %v496, 1.442695
    %v511 = vpow.pop %v510
    %v512 = vmul.f32 %v497, 1.442695
    %v513 = vpow.pop %v512
    %v514 = vsel %vm227, %v499, 0.0
    %515 = vadd.xlane.f32.xlu0 %v514
    %v516 = vpop.xlane.xlu0 %515
    %v517 = vsel %vm227, %v501, 0.0
    %518 = vadd.xlane.f32.xlu0 %v517
    %v519 = vpop.xlane.xlu0 %518
    %v520 = vsel %vm227, %v503, 0.0
    %521 = vadd.xlane.f32.xlu0 %v520
    %v522 = vpop.xlane.xlu0 %521
    %v523 = vsel %vm227, %v505, 0.0
    %524 = vadd.xlane.f32.xlu0 %v523
    %v525 = vpop.xlane.xlu0 %524
    %v526 = vsel %vm227, %v507, 0.0
    %527 = vadd.xlane.f32.xlu0 %v526
    %v528 = vpop.xlane.xlu0 %527
    %v529 = vsel %vm227, %v509, 0.0
    %530 = vadd.xlane.f32.xlu0 %v529
    %v531 = vpop.xlane.xlu0 %530
    %v532 = vsel %vm227, %v511, 0.0
    %533 = vadd.xlane.f32.xlu0 %v532
    %v534 = vpop.xlane.xlu0 %533
    %v535 = vsel %vm227, %v513, 0.0
    %536 = vadd.xlane.f32.xlu0 %v535
    %v537 = vpop.xlane.xlu0 %536
    %v538 = vrcp.pop %v516
    %v539 = vrcp.pop %v519
    %v540 = vrcp.pop %v522
    %v541 = vrcp.pop %v525
    %v542 = vrcp.pop %v528
    %v543 = vrcp.pop %v531
    %v544 = vrcp.pop %v534
    %v545 = vrcp.pop %v537
    %v546 = vmul.f32 %v499, %v538
    %v547 = vmul.f32 %v501, %v539
    %v548 = vmul.f32 %v503, %v540
    %v549 = vmul.f32 %v505, %v541
    %v550 = vmul.f32 %v507, %v542
    %v551 = vmul.f32 %v509, %v543
    %v552 = vmul.f32 %v511, %v544
    %v553 = vmul.f32 %v513, %v545
    %554 = vrot.lane.b32.xlu0 %v206, 64
    %v555 = vpop.permute.xlu0 %554
    %v558 = vsel %vm227, %v546, 0
    %560 = vmatpush.msra.mxu0 0.0
    %561 = vmatpush.msra.mxu0 0.0
    %562 = vmatpush.msra.mxu0 0.0
    %563 = vmatpush.msra.mxu0 0.0
    %564 = vmatpush.msra.mxu0 0.0
    %565 = vmatpush.msra.mxu0 0.0
    %566 = vmatpush.msra.mxu0 0.0
    %567 = vmatpush.msra.mxu0 0.0
    %568 = vmatpush.msra.mxu0 0.0
    %569 = vmatpush.msra.mxu0 0.0
    %570 = vmatpush.msra.mxu0 0.0
    %571 = vmatpush.msra.mxu0 0.0
    %572 = vmatpush.msra.mxu0 0.0
    %573 = vmatpush.msra.mxu0 0.0
    %574 = vmatpush.msra.mxu0 0.0
    %575 = vmatpush.msra.mxu0 %v555
    %576 = vmatmul.f32.gmra.mxu0 %v558
    %v577 = vpop.f32.mrf.mxu0
    %v578 = vadd.f32 0.0, %v577
    %579 = vdwg.mxu0
    %580 = vrot.lane.b32.xlu0 %v209, 64
    %v581 = vpop.permute.xlu0 %580
    %v584 = vsel %vm227, %v547, 0
    %586 = vmatpush.msra.mxu0 0.0
    %587 = vmatpush.msra.mxu0 0.0
    %588 = vmatpush.msra.mxu0 0.0
    %589 = vmatpush.msra.mxu0 0.0
    %590 = vmatpush.msra.mxu0 0.0
    %591 = vmatpush.msra.mxu0 0.0
    %592 = vmatpush.msra.mxu0 0.0
    %593 = vmatpush.msra.mxu0 0.0
    %594 = vmatpush.msra.mxu0 0.0
    %595 = vmatpush.msra.mxu0 0.0
    %596 = vmatpush.msra.mxu0 0.0
    %597 = vmatpush.msra.mxu0 0.0
    %598 = vmatpush.msra.mxu0 0.0
    %599 = vmatpush.msra.mxu0 0.0
    %600 = vmatpush.msra.mxu0 0.0
    %601 = vmatpush.msra.mxu0 %v581
    %602 = vmatmul.f32.gmra.mxu0 %v584
    %v603 = vpop.f32.mrf.mxu0
    %v604 = vadd.f32 0.0, %v603
    %605 = vdwg.mxu0
    %606 = vrot.lane.b32.xlu0 %v214, 64
    %v607 = vpop.permute.xlu0 %606
    %v610 = vsel %vm227, %v548, 0
    %612 = vmatpush.msra.mxu0 0.0
    %613 = vmatpush.msra.mxu0 0.0
    %614 = vmatpush.msra.mxu0 0.0
    %615 = vmatpush.msra.mxu0 0.0
    %616 = vmatpush.msra.mxu0 0.0
    %617 = vmatpush.msra.mxu0 0.0
    %618 = vmatpush.msra.mxu0 0.0
    %619 = vmatpush.msra.mxu0 0.0
    %620 = vmatpush.msra.mxu0 0.0
    %621 = vmatpush.msra.mxu0 0.0
    %622 = vmatpush.msra.mxu0 0.0
    %623 = vmatpush.msra.mxu0 0.0
    %624 = vmatpush.msra.mxu0 0.0
    %625 = vmatpush.msra.mxu0 0.0
    %626 = vmatpush.msra.mxu0 0.0
    %627 = vmatpush.msra.mxu0 %v607
    %628 = vmatmul.f32.gmra.mxu0 %v610
    %v629 = vpop.f32.mrf.mxu0
    %v630 = vadd.f32 0.0, %v629
    %631 = vdwg.mxu0
    %632 = vrot.lane.b32.xlu0 %v216, 64
    %v633 = vpop.permute.xlu0 %632
    %v636 = vsel %vm227, %v549, 0
    %638 = vmatpush.msra.mxu0 0.0
    %639 = vmatpush.msra.mxu0 0.0
    %640 = vmatpush.msra.mxu0 0.0
    %641 = vmatpush.msra.mxu0 0.0
    %642 = vmatpush.msra.mxu0 0.0
    %643 = vmatpush.msra.mxu0 0.0
    %644 = vmatpush.msra.mxu0 0.0
    %645 = vmatpush.msra.mxu0 0.0
    %646 = vmatpush.msra.mxu0 0.0
    %647 = vmatpush.msra.mxu0 0.0
    %648 = vmatpush.msra.mxu0 0.0
    %649 = vmatpush.msra.mxu0 0.0
    %650 = vmatpush.msra.mxu0 0.0
    %651 = vmatpush.msra.mxu0 0.0
    %652 = vmatpush.msra.mxu0 0.0
    %653 = vmatpush.msra.mxu0 %v633
    %654 = vmatmul.f32.gmra.mxu0 %v636
    %v655 = vpop.f32.mrf.mxu0
    %v656 = vadd.f32 0.0, %v655
    %657 = vdwg.mxu0
    %658 = vrot.lane.b32.xlu0 %v218, 64
    %v659 = vpop.permute.xlu0 %658
    %v662 = vsel %vm227, %v550, 0
    %664 = vmatpush.msra.mxu0 0.0
    %665 = vmatpush.msra.mxu0 0.0
    %666 = vmatpush.msra.mxu0 0.0
    %667 = vmatpush.msra.mxu0 0.0
    %668 = vmatpush.msra.mxu0 0.0
    %669 = vmatpush.msra.mxu0 0.0
    %670 = vmatpush.msra.mxu0 0.0
    %671 = vmatpush.msra.mxu0 0.0
    %672 = vmatpush.msra.mxu0 0.0
    %673 = vmatpush.msra.mxu0 0.0
    %674 = vmatpush.msra.mxu0 0.0
    %675 = vmatpush.msra.mxu0 0.0
    %676 = vmatpush.msra.mxu0 0.0
    %677 = vmatpush.msra.mxu0 0.0
    %678 = vmatpush.msra.mxu0 0.0
    %679 = vmatpush.msra.mxu0 %v659
    %680 = vmatmul.f32.gmra.mxu0 %v662
    %v681 = vpop.f32.mrf.mxu0
    %v682 = vadd.f32 0.0, %v681
    %683 = vdwg.mxu0
    %684 = vrot.lane.b32.xlu0 %v220, 64
    %v685 = vpop.permute.xlu0 %684
    %v688 = vsel %vm227, %v551, 0
    %690 = vmatpush.msra.mxu0 0.0
    %691 = vmatpush.msra.mxu0 0.0
    %692 = vmatpush.msra.mxu0 0.0
    %693 = vmatpush.msra.mxu0 0.0
    %694 = vmatpush.msra.mxu0 0.0
    %695 = vmatpush.msra.mxu0 0.0
    %696 = vmatpush.msra.mxu0 0.0
    %697 = vmatpush.msra.mxu0 0.0
    %698 = vmatpush.msra.mxu0 0.0
    %699 = vmatpush.msra.mxu0 0.0
    %700 = vmatpush.msra.mxu0 0.0
    %701 = vmatpush.msra.mxu0 0.0
    %702 = vmatpush.msra.mxu0 0.0
    %703 = vmatpush.msra.mxu0 0.0
    %704 = vmatpush.msra.mxu0 0.0
    %705 = vmatpush.msra.mxu0 %v685
    %706 = vmatmul.f32.gmra.mxu0 %v688
    %v707 = vpop.f32.mrf.mxu0
    %v708 = vadd.f32 0.0, %v707
    %709 = vdwg.mxu0
    %710 = vrot.lane.b32.xlu0 %v222, 64
    %v711 = vpop.permute.xlu0 %710
    %v714 = vsel %vm227, %v552, 0
    %716 = vmatpush.msra.mxu0 0.0
    %717 = vmatpush.msra.mxu0 0.0
    %718 = vmatpush.msra.mxu0 0.0
    %719 = vmatpush.msra.mxu0 0.0
    %720 = vmatpush.msra.mxu0 0.0
    %721 = vmatpush.msra.mxu0 0.0
    %722 = vmatpush.msra.mxu0 0.0
    %723 = vmatpush.msra.mxu0 0.0
    %724 = vmatpush.msra.mxu0 0.0
    %725 = vmatpush.msra.mxu0 0.0
    %726 = vmatpush.msra.mxu0 0.0
    %727 = vmatpush.msra.mxu0 0.0
    %728 = vmatpush.msra.mxu0 0.0
    %729 = vmatpush.msra.mxu0 0.0
    %730 = vmatpush.msra.mxu0 0.0
    %731 = vmatpush.msra.mxu0 %v711
    %732 = vmatmul.f32.gmra.mxu0 %v714
    %v733 = vpop.f32.mrf.mxu0
    %v734 = vadd.f32 0.0, %v733
    %735 = vdwg.mxu0
    %736 = vrot.lane.b32.xlu0 %v224, 64
    %v737 = vpop.permute.xlu0 %736
    %v740 = vsel %vm227, %v553, 0
    %742 = vmatpush.msra.mxu0 0.0
    %743 = vmatpush.msra.mxu0 0.0
    %744 = vmatpush.msra.mxu0 0.0
    %745 = vmatpush.msra.mxu0 0.0
    %746 = vmatpush.msra.mxu0 0.0
    %747 = vmatpush.msra.mxu0 0.0
    %748 = vmatpush.msra.mxu0 0.0
    %749 = vmatpush.msra.mxu0 0.0
    %750 = vmatpush.msra.mxu0 0.0
    %751 = vmatpush.msra.mxu0 0.0
    %752 = vmatpush.msra.mxu0 0.0
    %753 = vmatpush.msra.mxu0 0.0
    %754 = vmatpush.msra.mxu0 0.0
    %755 = vmatpush.msra.mxu0 0.0
    %756 = vmatpush.msra.mxu0 0.0
    %757 = vmatpush.msra.mxu0 %v737
    %758 = vmatmul.f32.gmra.mxu0 %v740
    %v759 = vpop.f32.mrf.mxu0
    %v760 = vadd.f32 0.0, %v759
    %761 = vdwg.mxu0
    %764 = vrot.lane.b32.xlu0 %v630, 8
    %v765 = vpop.permute.xlu0 %764
    %766 = vrot.lane.b32.xlu0 %v656, 8
    %v767 = vpop.permute.xlu0 %766
    %772 = vrot.lane.b32.xlu0 %v682, 16
    %v773 = vpop.permute.xlu0 %772
    %774 = vrot.lane.b32.xlu0 %v708, 16
    %v775 = vpop.permute.xlu0 %774
    %780 = vrot.lane.b32.xlu0 %v734, 24
    %v781 = vpop.permute.xlu0 %780
    %782 = vrot.lane.b32.xlu0 %v760, 24
    %v783 = vpop.permute.xlu0 %782
    %v786 = vsel %vm227, %v578, %v765
    %v787 = vsel %vm227, %v604, %v767
    %vm788 = vcmask 130048
    %v789 = vsel %vm788, %v786, %v773
    %v790 = vsel %vm788, %v787, %v775
    %vm791 = vcmask 195584
    %v792 = vsel %vm791, %v789, %v781
    %v793 = vsel %vm791, %v790, %v783
    %v794 = vld [vmem:[#allocation2 + $0x88] sm:$0xff]
    %v795 = vld [vmem:[#allocation2 + $0x90] sm:$0xff]
    %v796 = vld [vmem:[#allocation2 + $0x98] sm:$0xff]
    %v797 = vld [vmem:[#allocation2 + $0xa0] sm:$0xff]
    %v798 = vld [vmem:[#allocation2 + $0xa8] sm:$0x1]
    %v799 = vperm.slane %v798, 0
    %v801 = vsel %vm89, %v792, 0
    %v804 = vsel %vm89, %v793, 0
    %806 = vmatpush.msra.mxu0 0.0
    %807 = vmatpush.msra.mxu0 0.0
    %808 = vmatpush.msra.mxu0 0.0
    %809 = vmatpush.msra.mxu0 0.0
    %810 = vmatpush.msra.mxu0 0.0
    %811 = vmatpush.msra.mxu0 0.0
    %812 = vmatpush.msra.mxu0 0.0
    %813 = vmatpush.msra.mxu0 0.0
    %814 = vmatpush.msra.mxu0 0.0
    %815 = vmatpush.msra.mxu0 0.0
    %816 = vmatpush.msra.mxu0 0.0
    %817 = vmatpush.msra.mxu0 0.0
    %818 = vmatpush.msra.mxu0 %v797
    %819 = vmatpush.msra.mxu0 %v796
    %820 = vmatpush.msra.mxu0 %v795
    %821 = vmatpush.msra.mxu0 %v794
    %822 = vmatmul.f32.gmra.mxu0 %v801
    %v823 = vpop.f32.mrf.mxu0
    %v824 = vadd.f32 %v799, %v823
    %825 = vmatmul.f32.gmra.mxu0 %v804
    %v826 = vpop.f32.mrf.mxu0
    %v827 = vadd.f32 %v799, %v826
    %828 = vdwg.mxu0
    %v829 = vadd.f32 %v824, %v149
    %v830 = vadd.f32 %v827, %v150
    %v831 = vld [vmem:[#allocation2 + $0xb0] sm:$0x1]
    %v832 = vld [vmem:[#allocation2 + $0xb8] sm:$0x1]
    %v833 = vsel %vm89, %v829, 0.0
    %834 = vadd.xlane.f32.xlu0 %v833
    %v835 = vpop.xlane.xlu0 %834
    %v836 = vsel %vm89, %v830, 0.0
    %837 = vadd.xlane.f32.xlu0 %v836
    %v838 = vpop.xlane.xlu0 %837
    %v839 = vmul.f32 %v835, %v102
    %v840 = vmul.f32 %v838, %v102
    %v841 = vmul.f32 %v829, %v829
    %v842 = vmul.f32 %v830, %v830
    %v843 = vsel %vm89, %v841, 0.0
    %844 = vadd.xlane.f32.xlu0 %v843
    %v845 = vpop.xlane.xlu0 %844
    %v846 = vsel %vm89, %v842, 0.0
    %847 = vadd.xlane.f32.xlu0 %v846
    %v848 = vpop.xlane.xlu0 %847
    %v849 = vmul.f32 %v845, %v102
    %v850 = vmul.f32 %v848, %v102
    %v851 = vmul.f32 %v839, %v839
    %v852 = vmul.f32 %v840, %v840
    %v853 = vsub.f32 %v849, %v851
    %v854 = vsub.f32 %v850, %v852
    %v855 = vsub.f32 %v829, %v839
    %v856 = vsub.f32 %v830, %v840
    %v857 = vadd.f32 %v853, 1e-12
    %v858 = vadd.f32 %v854, 1e-12
    %v859 = vrsqrt.pop %v857
    %v860 = vmul.f32 %v859, %v857
    %v861 = vmul.f32 %v860, %v859
    %v862 = vmul.f32 0.5, %v861
    %v863 = vsub.f32 1.5, %v862
    %v864 = vmul.f32 %v859, %v863
    %vm865 = vweird.f32 %v857
    %vm866 = vweird.f32 %v859
    %vm867 = vmor %vm865, %vm866
    %v868 = vsel %vm867, %v859, %v864
    %v869 = vrsqrt.pop %v858
    %v870 = vmul.f32 %v869, %v858
    %v871 = vmul.f32 %v870, %v869
    %v872 = vmul.f32 0.5, %v871
    %v873 = vsub.f32 1.5, %v872
    %v874 = vmul.f32 %v869, %v873
    %vm875 = vweird.f32 %v858
    %vm876 = vweird.f32 %v869
    %vm877 = vmor %vm875, %vm876
    %v878 = vsel %vm877, %v869, %v874
    %v879 = vmul.f32 %v855, %v868
    %v880 = vmul.f32 %v856, %v878
    %v881 = vperm.slane %v831, 0
    %v882 = vmul.f32 %v879, %v881
    %v883 = vmul.f32 %v880, %v881
    %v884 = vperm.slane %v832, 0
    %v885 = vadd.f32 %v882, %v884
    %v886 = vadd.f32 %v883, %v884
    %v887 = vld [vmem:[#allocation2 + $0xc0] sm:$0xff]
    %v888 = vld [vmem:[#allocation2 + $0xc8] sm:$0xff]
    %v889 = vld [vmem:[#allocation2 + $0xd0] sm:$0xff]
    %v890 = vld [vmem:[#allocation2 + $0xd8] sm:$0xff]
    %v891 = vld [vmem:[#allocation2 + $0xe0] sm:$0x1]
    %v892 = vperm.slane %v891, 0
    %v894 = vsel %vm89, %v885, 0
    %v897 = vsel %vm89, %v886, 0
    %899 = vmatpush.msra.mxu0 0.0
    %900 = vmatpush.msra.mxu0 0.0
    %901 = vmatpush.msra.mxu0 0.0
    %902 = vmatpush.msra.mxu0 0.0
    %903 = vmatpush.msra.mxu0 0.0
    %904 = vmatpush.msra.mxu0 0.0
    %905 = vmatpush.msra.mxu0 0.0
    %906 = vmatpush.msra.mxu0 0.0
    %907 = vmatpush.msra.mxu0 0.0
    %908 = vmatpush.msra.mxu0 0.0
    %909 = vmatpush.msra.mxu0 0.0
    %910 = vmatpush.msra.mxu0 0.0
    %911 = vmatpush.msra.mxu0 %v890
    %912 = vmatpush.msra.mxu0 %v889
    %913 = vmatpush.msra.mxu0 %v888
    %914 = vmatpush.msra.mxu0 %v887
    %915 = vmatmul.f32.gmra.mxu0 %v894
    %v916 = vpop.f32.mrf.mxu0
    %v917 = vadd.f32 %v892, %v916
    %918 = vmatmul.f32.gmra.mxu0 %v897
    %v919 = vpop.f32.mrf.mxu0
    %v920 = vadd.f32 %v892, %v919
    %921 = vdwg.mxu0
    %v922 = vmul.f32 %v917, 0.5
    %v923 = vmul.f32 %v920, 0.5
    %v924 = vmul.f32 %v917, 0.044715
    %v925 = vmul.f32 %v920, 0.044715
    %v926 = vmul.f32 %v924, %v917
    %v927 = vmul.f32 %v925, %v920
    %v928 = vmul.f32 %v926, %v917
    %v929 = vmul.f32 %v927, %v920
    %v930 = vadd.f32 %v917, %v928
    %v931 = vadd.f32 %v920, %v929
    %v932 = vmul.f32 %v930, 0.7978846
    %v933 = vmul.f32 %v931, 0.7978846
    %v934 = vtanh.pop %v932
    %v935 = vtanh.pop %v933
    %v936 = vadd.f32 %v934, 1.0
    %v937 = vadd.f32 %v935, 1.0
    %v938 = vmul.f32 %v922, %v936
    %v939 = vmul.f32 %v923, %v937
    %v940 = vld [vmem:[#allocation2 + $0xe8] sm:$0xff]
    %v941 = vld [vmem:[#allocation2 + $0xf0] sm:$0xff]
    %v942 = vld [vmem:[#allocation2 + $0xf8] sm:$0xff]
    %v943 = vld [vmem:[#allocation2 + $0x100] sm:$0xff]
    %v944 = vld [vmem:[#allocation2 + $0x108] sm:$0xff]
    %v945 = vld [vmem:[#allocation2 + $0x110] sm:$0xff]
    %v946 = vld [vmem:[#allocation2 + $0x118] sm:$0xff]
    %v947 = vld [vmem:[#allocation2 + $0x120] sm:$0xff]
    %v948 = vld [vmem:[#allocation2 + $0x128] sm:$0x1]
    %v949 = vperm.slane %v948, 0
    %v951 = vsel %vm57, %v938, 0
    %v954 = vsel %vm57, %v939, 0
    %956 = vmatpush.msra.mxu0 0.0
    %957 = vmatpush.msra.mxu0 0.0
    %958 = vmatpush.msra.mxu0 0.0
    %959 = vmatpush.msra.mxu0 0.0
    %960 = vmatpush.msra.mxu0 0.0
    %961 = vmatpush.msra.mxu0 0.0
    %962 = vmatpush.msra.mxu0 0.0
    %963 = vmatpush.msra.mxu0 0.0
    %964 = vmatpush.msra.mxu0 %v947
    %965 = vmatpush.msra.mxu0 %v946
    %966 = vmatpush.msra.mxu0 %v945
    %967 = vmatpush.msra.mxu0 %v944
    %968 = vmatpush.msra.mxu0 %v943
    %969 = vmatpush.msra.mxu0 %v942
    %970 = vmatpush.msra.mxu0 %v941
    %971 = vmatpush.msra.mxu0 %v940
    %972 = vmatmul.f32.gmra.mxu0 %v951
    %v973 = vpop.f32.mrf.mxu0
    %v974 = vadd.f32 %v949, %v973
    %975 = vmatmul.f32.gmra.mxu0 %v954
    %v976 = vpop.f32.mrf.mxu0
    %v977 = vadd.f32 %v949, %v976
    %978 = vdwg.mxu0
    %v979 = vadd.f32 %v974, %v885
    %v980 = vadd.f32 %v977, %v886
    %v981 = vld [vmem:[#allocation2 + $0x130] sm:$0x1]
    %v982 = vld [vmem:[#allocation2 + $0x138] sm:$0x1]
    %v983 = vsel %vm89, %v979, 0.0
    %984 = vadd.xlane.f32.xlu0 %v983
    %v985 = vpop.xlane.xlu0 %984
    %v986 = vsel %vm89, %v980, 0.0
    %987 = vadd.xlane.f32.xlu0 %v986
    %v988 = vpop.xlane.xlu0 %987
    %v989 = vmul.f32 %v985, %v102
    %v990 = vmul.f32 %v988, %v102
    %v991 = vmul.f32 %v979, %v979
    %v992 = vmul.f32 %v980, %v980
    %v993 = vsel %vm89, %v991, 0.0
    %994 = vadd.xlane.f32.xlu0 %v993
    %v995 = vpop.xlane.xlu0 %994
    %v996 = vsel %vm89, %v992, 0.0
    %997 = vadd.xlane.f32.xlu0 %v996
    %v998 = vpop.xlane.xlu0 %997
    %v999 = vmul.f32 %v995, %v102
    %v1000 = vmul.f32 %v998, %v102
    %v1001 = vmul.f32 %v989, %v989
    %v1002 = vmul.f32 %v990, %v990
    %v1003 = vsub.f32 %v999, %v1001
    %v1004 = vsub.f32 %v1000, %v1002
    %v1005 = vsub.f32 %v979, %v989
    %v1006 = vsub.f32 %v980, %v990
    %v1007 = vadd.f32 %v1003, 1e-12
    %v1008 = vadd.f32 %v1004, 1e-12
    %v1009 = vrsqrt.pop %v1007
    %v1010 = vmul.f32 %v1009, %v1007
    %v1011 = vmul.f32 %v1010, %v1009
    %v1012 = vmul.f32 0.5, %v1011
    %v1013 = vsub.f32 1.5, %v1012
    %v1014 = vmul.f32 %v1009, %v1013
    %vm1015 = vweird.f32 %v1007
    %vm1016 = vweird.f32 %v1009
    %vm1017 = vmor %vm1015, %vm1016
    %v1018 = vsel %vm1017, %v1009, %v1014
    %v1019 = vrsqrt.pop %v1008
    %v1020 = vmul.f32 %v1019, %v1008
    %v1021 = vmul.f32 %v1020, %v1019
    %v1022 = vmul.f32 0.5, %v1021
    %v1023 = vsub.f32 1.5, %v1022
    %v1024 = vmul.f32 %v1019, %v1023
    %vm1025 = vweird.f32 %v1008
    %vm1026 = vweird.f32 %v1019
    %vm1027 = vmor %vm1025, %vm1026
    %v1028 = vsel %vm1027, %v1019, %v1024
    %v1029 = vmul.f32 %v1005, %v1018
    %v1030 = vmul.f32 %v1006, %v1028
    %v1031 = vperm.slane %v981, 0
    %v1032 = vmul.f32 %v1029, %v1031
    %v1033 = vmul.f32 %v1030, %v1031
    %v1034 = vperm.slane %v982, 0
    %v1035 = vadd.f32 %v1032, %v1034
    %v1036 = vadd.f32 %v1033, %v1034
    %v1037 = vld [vmem:[#allocation2 + $0x140] sm:$0xff]
    %v1038 = vld [vmem:[#allocation2 + $0x148] sm:$0xff]
    %v1039 = vld [vmem:[#allocation2 + $0x150] sm:$0xff]
    %v1040 = vld [vmem:[#allocation2 + $0x158] sm:$0xff]
    %v1041 = vld [vmem:[#allocation2 + $0x160] sm:$0x1]
    %v1042 = vperm.slane %v1041, 0
    %v1044 = vsel %vm89, %v1035, 0
    %v1047 = vsel %vm89, %v1036, 0
    %1049 = vmatpush.msra.mxu0 0.0
    %1050 = vmatpush.msra.mxu0 0.0
    %1051 = vmatpush.msra.mxu0 0.0
    %1052 = vmatpush.msra.mxu0 0.0
    %1053 = vmatpush.msra.mxu0 0.0
    %1054 = vmatpush.msra.mxu0 0.0
    %1055 = vmatpush.msra.mxu0 0.0
    %1056 = vmatpush.msra.mxu0 0.0
    %1057 = vmatpush.msra.mxu0 0.0
    %1058 = vmatpush.msra.mxu0 0.0
    %1059 = vmatpush.msra.mxu0 0.0
    %1060 = vmatpush.msra.mxu0 0.0
    %1061 = vmatpush.msra.mxu0 %v1040
    %1062 = vmatpush.msra.mxu0 %v1039
    %1063 = vmatpush.msra.mxu0 %v1038
    %1064 = vmatpush.msra.mxu0 %v1037
    %1065 = vmatmul.f32.gmra.mxu0 %v1044
    %v1066 = vpop.f32.mrf.mxu0
    %v1067 = vadd.f32 %v1042, %v1066
    %1068 = vmatmul.f32.gmra.mxu0 %v1047
    %v1069 = vpop.f32.mrf.mxu0
    %v1070 = vadd.f32 %v1042, %v1069
    %1071 = vdwg.mxu0
    %1074 = vrot.lane.b32.xlu0 %v1067, 120
    %v1075 = vpop.permute.xlu0 %1074
    %1076 = vrot.lane.b32.xlu0 %v1070, 120
    %v1077 = vpop.permute.xlu0 %1076
    %1078 = vrot.lane.b32.xlu0 %v1067, 112
    %v1079 = vpop.permute.xlu0 %1078
    %1080 = vrot.lane.b32.xlu0 %v1070, 112
    %v1081 = vpop.permute.xlu0 %1080
    %1082 = vrot.lane.b32.xlu0 %v1067, 104
    %v1083 = vpop.permute.xlu0 %1082
    %1084 = vrot.lane.b32.xlu0 %v1070, 104
    %v1085 = vpop.permute.xlu0 %1084
    %1086 = vrot.lane.b32.xlu0 %v1067, 96
    %v1087 = vpop.permute.xlu0 %1086
    %v1088 = vsel %vm227, %v1067, 0
    %v1090 = vsel %vm227, %v1087, 0
    %1092 = vmatpush.xpose.msra.mxu0 0.0
    %1093 = vmatpush.xpose.msra.mxu0 0.0
    %1094 = vmatpush.xpose.msra.mxu0 0.0
    %1095 = vmatpush.xpose.msra.mxu0 0.0
    %1096 = vmatpush.xpose.msra.mxu0 0.0
    %1097 = vmatpush.xpose.msra.mxu0 0.0
    %1098 = vmatpush.xpose.msra.mxu0 0.0
    %1099 = vmatpush.xpose.msra.mxu0 0.0
    %1100 = vmatpush.xpose.msra.mxu0 0.0
    %1101 = vmatpush.xpose.msra.mxu0 0.0
    %1102 = vmatpush.xpose.msra.mxu0 0.0
    %1103 = vmatpush.xpose.msra.mxu0 0.0
    %1104 = vmatpush.xpose.msra.mxu0 0.0
    %1105 = vmatpush.xpose.msra.mxu0 0.0
    %1106 = vmatpush.xpose.msra.mxu0 0.0
    %1107 = vmatpush.xpose.msra.mxu0 %v1090
    %1108 = vmatmul.f32.gmra.mxu0 %v1088
    %v1109 = vpop.f32.mrf.mxu0
    %v1110 = vadd.f32 0.0, %v1109
    %1111 = vdwg.mxu0
    %1112 = vrot.lane.b32.xlu0 %v1070, 96
    %v1113 = vpop.permute.xlu0 %1112
    %v1114 = vsel %vm227, %v1070, 0
    %v1116 = vsel %vm227, %v1113, 0
    %1118 = vmatpush.xpose.msra.mxu0 0.0
    %1119 = vmatpush.xpose.msra.mxu0 0.0
    %1120 = vmatpush.xpose.msra.mxu0 0.0
    %1121 = vmatpush.xpose.msra.mxu0 0.0
    %1122 = vmatpush.xpose.msra.mxu0 0.0
    %1123 = vmatpush.xpose.msra.mxu0 0.0
    %1124 = vmatpush.xpose.msra.mxu0 0.0
    %1125 = vmatpush.xpose.msra.mxu0 0.0
    %1126 = vmatpush.xpose.msra.mxu0 0.0
    %1127 = vmatpush.xpose.msra.mxu0 0.0
    %1128 = vmatpush.xpose.msra.mxu0 0.0
    %1129 = vmatpush.xpose.msra.mxu0 0.0
    %1130 = vmatpush.xpose.msra.mxu0 0.0
    %1131 = vmatpush.xpose.msra.mxu0 0.0
    %1132 = vmatpush.xpose.msra.mxu0 0.0
    %1133 = vmatpush.xpose.msra.mxu0 %v1116
    %1134 = vmatmul.f32.gmra.mxu0 %v1114
    %v1135 = vpop.f32.mrf.mxu0
    %v1136 = vadd.f32 0.0, %v1135
    %1137 = vdwg.mxu0
    %1138 = vrot.lane.b32.xlu0 %v1075, 96
    %v1139 = vpop.permute.xlu0 %1138
    %v1140 = vsel %vm227, %v1075, 0
    %v1142 = vsel %vm227, %v1139, 0
    %1144 = vmatpush.xpose.msra.mxu0 0.0
    %1145 = vmatpush.xpose.msra.mxu0 0.0
    %1146 = vmatpush.xpose.msra.mxu0 0.0
    %1147 = vmatpush.xpose.msra.mxu0 0.0
    %1148 = vmatpush.xpose.msra.mxu0 0.0
    %1149 = vmatpush.xpose.msra.mxu0 0.0
    %1150 = vmatpush.xpose.msra.mxu0 0.0
    %1151 = vmatpush.xpose.msra.mxu0 0.0
    %1152 = vmatpush.xpose.msra.mxu0 0.0
    %1153 = vmatpush.xpose.msra.mxu0 0.0
    %1154 = vmatpush.xpose.msra.mxu0 0.0
    %1155 = vmatpush.xpose.msra.mxu0 0.0
    %1156 = vmatpush.xpose.msra.mxu0 0.0
    %1157 = vmatpush.xpose.msra.mxu0 0.0
    %1158 = vmatpush.xpose.msra.mxu0 0.0
    %1159 = vmatpush.xpose.msra.mxu0 %v1142
    %1160 = vmatmul.f32.gmra.mxu0 %v1140
    %v1161 = vpop.f32.mrf.mxu0
    %v1162 = vadd.f32 0.0, %v1161
    %1163 = vdwg.mxu0
    %1164 = vrot.lane.b32.xlu0 %v1077, 96
    %v1165 = vpop.permute.xlu0 %1164
    %v1166 = vsel %vm227, %v1077, 0
    %v1168 = vsel %vm227, %v1165, 0
    %1170 = vmatpush.xpose.msra.mxu0 0.0
    %1171 = vmatpush.xpose.msra.mxu0 0.0
    %1172 = vmatpush.xpose.msra.mxu0 0.0
    %1173 = vmatpush.xpose.msra.mxu0 0.0
    %1174 = vmatpush.xpose.msra.mxu0 0.0
    %1175 = vmatpush.xpose.msra.mxu0 0.0
    %1176 = vmatpush.xpose.msra.mxu0 0.0
    %1177 = vmatpush.xpose.msra.mxu0 0.0
    %1178 = vmatpush.xpose.msra.mxu0 0.0
    %1179 = vmatpush.xpose.msra.mxu0 0.0
    %1180 = vmatpush.xpose.msra.mxu0 0.0
    %1181 = vmatpush.xpose.msra.mxu0 0.0
    %1182 = vmatpush.xpose.msra.mxu0 0.0
    %1183 = vmatpush.xpose.msra.mxu0 0.0
    %1184 = vmatpush.xpose.msra.mxu0 0.0
    %1185 = vmatpush.xpose.msra.mxu0 %v1168
    %1186 = vmatmul.f32.gmra.mxu0 %v1166
    %v1187 = vpop.f32.mrf.mxu0
    %v1188 = vadd.f32 0.0, %v1187
    %1189 = vdwg.mxu0
    %1190 = vrot.lane.b32.xlu0 %v1079, 96
    %v1191 = vpop.permute.xlu0 %1190
    %v1192 = vsel %vm227, %v1079, 0
    %v1194 = vsel %vm227, %v1191, 0
    %1196 = vmatpush.xpose.msra.mxu0 0.0
    %1197 = vmatpush.xpose.msra.mxu0 0.0
    %1198 = vmatpush.xpose.msra.mxu0 0.0
    %1199 = vmatpush.xpose.msra.mxu0 0.0
    %1200 = vmatpush.xpose.msra.mxu0 0.0
    %1201 = vmatpush.xpose.msra.mxu0 0.0
    %1202 = vmatpush.xpose.msra.mxu0 0.0
    %1203 = vmatpush.xpose.msra.mxu0 0.0
    %1204 = vmatpush.xpose.msra.mxu0 0.0
    %1205 = vmatpush.xpose.msra.mxu0 0.0
    %1206 = vmatpush.xpose.msra.mxu0 0.0
    %1207 = vmatpush.xpose.msra.mxu0 0.0
    %1208 = vmatpush.xpose.msra.mxu0 0.0
    %1209 = vmatpush.xpose.msra.mxu0 0.0
    %1210 = vmatpush.xpose.msra.mxu0 0.0
    %1211 = vmatpush.xpose.msra.mxu0 %v1194
    %1212 = vmatmul.f32.gmra.mxu0 %v1192
    %v1213 = vpop.f32.mrf.mxu0
    %v1214 = vadd.f32 0.0, %v1213
    %1215 = vdwg.mxu0
    %1216 = vrot.lane.b32.xlu0 %v1081, 96
    %v1217 = vpop.permute.xlu0 %1216
    %v1218 = vsel %vm227, %v1081, 0
    %v1220 = vsel %vm227, %v1217, 0
    %1222 = vmatpush.xpose.msra.mxu0 0.0
    %1223 = vmatpush.xpose.msra.mxu0 0.0
    %1224 = vmatpush.xpose.msra.mxu0 0.0
    %1225 = vmatpush.xpose.msra.mxu0 0.0
    %1226 = vmatpush.xpose.msra.mxu0 0.0
    %1227 = vmatpush.xpose.msra.mxu0 0.0
    %1228 = vmatpush.xpose.msra.mxu0 0.0
    %1229 = vmatpush.xpose.msra.mxu0 0.0
    %1230 = vmatpush.xpose.msra.mxu0 0.0
    %1231 = vmatpush.xpose.msra.mxu0 0.0
    %1232 = vmatpush.xpose.msra.mxu0 0.0
    %1233 = vmatpush.xpose.msra.mxu0 0.0
    %1234 = vmatpush.xpose.msra.mxu0 0.0
    %1235 = vmatpush.xpose.msra.mxu0 0.0
    %1236 = vmatpush.xpose.msra.mxu0 0.0
    %1237 = vmatpush.xpose.msra.mxu0 %v1220
    %1238 = vmatmul.f32.gmra.mxu0 %v1218
    %v1239 = vpop.f32.mrf.mxu0
    %v1240 = vadd.f32 0.0, %v1239
    %1241 = vdwg.mxu0
    %1242 = vrot.lane.b32.xlu0 %v1083, 96
    %v1243 = vpop.permute.xlu0 %1242
    %v1244 = vsel %vm227, %v1083, 0
    %v1246 = vsel %vm227, %v1243, 0
    %1248 = vmatpush.xpose.msra.mxu0 0.0
    %1249 = vmatpush.xpose.msra.mxu0 0.0
    %1250 = vmatpush.xpose.msra.mxu0 0.0
    %1251 = vmatpush.xpose.msra.mxu0 0.0
    %1252 = vmatpush.xpose.msra.mxu0 0.0
    %1253 = vmatpush.xpose.msra.mxu0 0.0
    %1254 = vmatpush.xpose.msra.mxu0 0.0
    %1255 = vmatpush.xpose.msra.mxu0 0.0
    %1256 = vmatpush.xpose.msra.mxu0 0.0
    %1257 = vmatpush.xpose.msra.mxu0 0.0
    %1258 = vmatpush.xpose.msra.mxu0 0.0
    %1259 = vmatpush.xpose.msra.mxu0 0.0
    %1260 = vmatpush.xpose.msra.mxu0 0.0
    %1261 = vmatpush.xpose.msra.mxu0 0.0
    %1262 = vmatpush.xpose.msra.mxu0 0.0
    %1263 = vmatpush.xpose.msra.mxu0 %v1246
    %1264 = vmatmul.f32.gmra.mxu0 %v1244
    %v1265 = vpop.f32.mrf.mxu0
    %v1266 = vadd.f32 0.0, %v1265
    %1267 = vdwg.mxu0
    %1268 = vrot.lane.b32.xlu0 %v1085, 96
    %v1269 = vpop.permute.xlu0 %1268
    %v1270 = vsel %vm227, %v1085, 0
    %v1272 = vsel %vm227, %v1269, 0
    %1274 = vmatpush.xpose.msra.mxu0 0.0
    %1275 = vmatpush.xpose.msra.mxu0 0.0
    %1276 = vmatpush.xpose.msra.mxu0 0.0
    %1277 = vmatpush.xpose.msra.mxu0 0.0
    %1278 = vmatpush.xpose.msra.mxu0 0.0
    %1279 = vmatpush.xpose.msra.mxu0 0.0
    %1280 = vmatpush.xpose.msra.mxu0 0.0
    %1281 = vmatpush.xpose.msra.mxu0 0.0
    %1282 = vmatpush.xpose.msra.mxu0 0.0
    %1283 = vmatpush.xpose.msra.mxu0 0.0
    %1284 = vmatpush.xpose.msra.mxu0 0.0
    %1285 = vmatpush.xpose.msra.mxu0 0.0
    %1286 = vmatpush.xpose.msra.mxu0 0.0
    %1287 = vmatpush.xpose.msra.mxu0 0.0
    %1288 = vmatpush.xpose.msra.mxu0 0.0
    %1289 = vmatpush.xpose.msra.mxu0 %v1272
    %1290 = vmatmul.f32.gmra.mxu0 %v1270
    %v1291 = vpop.f32.mrf.mxu0
    %v1292 = vadd.f32 0.0, %v1291
    %1293 = vdwg.mxu0
    %v1294 = vmul.f32 %v1110, 0.35355338
    %v1295 = vmul.f32 %v1136, 0.35355338
    %v1296 = vmul.f32 %v1162, 0.35355338
    %v1297 = vmul.f32 %v1188, 0.35355338
    %v1298 = vmul.f32 %v1214, 0.35355338
    %v1299 = vmul.f32 %v1240, 0.35355338
    %v1300 = vmul.f32 %v1266, 0.35355338
    %v1301 = vmul.f32 %v1292, 0.35355338
    %v1302 = vadd.f32 %v1294, %v442
    %v1303 = vadd.f32 %v1295, %v443
    %v1304 = vadd.f32 %v1296, %v444
    %v1305 = vadd.f32 %v1297, %v445
    %v1306 = vadd.f32 %v1298, %v446
    %v1307 = vadd.f32 %v1299, %v447
    %v1308 = vadd.f32 %v1300, %v448
    %v1309 = vadd.f32 %v1301, %v449
    %v1310 = vsel %vm227, %v1302, -inf
    %1311 = vmax.xlane.f32.xlu0 %v1310
    %v1312 = vpop.xlane.xlu0 %1311
    %v1313 = vsel %vm227, %v1303, -inf
    %1314 = vmax.xlane.f32.xlu0 %v1313
    %v1315 = vpop.xlane.xlu0 %1314
    %v1316 = vsel %vm227, %v1304, -inf
    %1317 = vmax.xlane.f32.xlu0 %v1316
    %v1318 = vpop.xlane.xlu0 %1317
    %v1319 = vsel %vm227, %v1305, -inf
    %1320 = vmax.xlane.f32.xlu0 %v1319
    %v1321 = vpop.xlane.xlu0 %1320
    %v1322 = vsel %vm227, %v1306, -inf
    %1323 = vmax.xlane.f32.xlu0 %v1322
    %v1324 = vpop.xlane.xlu0 %1323
    %v1325 = vsel %vm227, %v1307, -inf
    %1326 = vmax.xlane.f32.xlu0 %v1325
    %v1327 = vpop.xlane.xlu0 %1326
    %v1328 = vsel %vm227, %v1308, -inf
    %1329 = vmax.xlane.f32.xlu0 %v1328
    %v1330 = vpop.xlane.xlu0 %1329
    %v1331 = vsel %vm227, %v1309, -inf
    %1332 = vmax.xlane.f32.xlu0 %v1331
    %v1333 = vpop.xlane.xlu0 %1332
    %v1334 = vsub.f32 %v1302, %v1312
    %v1335 = vsub.f32 %v1303, %v1315
    %v1336 = vsub.f32 %v1304, %v1318
    %v1337 = vsub.f32 %v1305, %v1321
    %v1338 = vsub.f32 %v1306, %v1324
    %v1339 = vsub.f32 %v1307, %v1327
    %v1340 = vsub.f32 %v1308, %v1330
    %v1341 = vsub.f32 %v1309, %v1333
    %v1342 = vmul.f32 %v1334, 1.442695
    %v1343 = vpow.pop %v1342
    %v1344 = vmul.f32 %v1335, 1.442695
    %v1345 = vpow.pop %v1344
    %v1346 = vmul.f32 %v1336, 1.442695
    %v1347 = vpow.pop %v1346
    %v1348 = vmul.f32 %v1337, 1.442695
    %v1349 = vpow.pop %v1348
    %v1350 = vmul.f32 %v1338, 1.442695
    %v1351 = vpow.pop %v1350
    %v1352 = vmul.f32 %v1339, 1.442695
    %v1353 = vpow.pop %v1352
    %v1354 = vmul.f32 %v1340, 1.442695
    %v1355 = vpow.pop %v1354
    %v1356 = vmul.f32 %v1341, 1.442695
    %v1357 = vpow.pop %v1356
    %v1358 = vsel %vm227, %v1343, 0.0
    %1359 = vadd.xlane.f32.xlu0 %v1358
    %v1360 = vpop.xlane.xlu0 %1359
    %v1361 = vsel %vm227, %v1345, 0.0
    %1362 = vadd.xlane.f32.xlu0 %v1361
    %v1363 = vpop.xlane.xlu0 %1362
    %v1364 = vsel %vm227, %v1347, 0.0
    %1365 = vadd.xlane.f32.xlu0 %v1364
    %v1366 = vpop.xlane.xlu0 %1365
    %v1367 = vsel %vm227, %v1349, 0.0
    %1368 = vadd.xlane.f32.xlu0 %v1367
    %v1369 = vpop.xlane.xlu0 %1368
    %v1370 = vsel %vm227, %v1351, 0.0
    %1371 = vadd.xlane.f32.xlu0 %v1370
    %v1372 = vpop.xlane.xlu0 %1371
    %v1373 = vsel %vm227, %v1353, 0.0
    %1374 = vadd.xlane.f32.xlu0 %v1373
    %v1375 = vpop.xlane.xlu0 %1374
    %v1376 = vsel %vm227, %v1355, 0.0
    %1377 = vadd.xlane.f32.xlu0 %v1376
    %v1378 = vpop.xlane.xlu0 %1377
    %v1379 = vsel %vm227, %v1357, 0.0
    %1380 = vadd.xlane.f32.xlu0 %v1379
    %v1381 = vpop.xlane.xlu0 %1380
    %v1382 = vrcp.pop %v1360
    %v1383 = vrcp.pop %v1363
    %v1384 = vrcp.pop %v1366
    %v1385 = vrcp.pop %v1369
    %v1386 = vrcp.pop %v1372
    %v1387 = vrcp.pop %v1375
    %v1388 = vrcp.pop %v1378
    %v1389 = vrcp.pop %v1381
    %v1390 = vmul.f32 %v1343, %v1382
    %v1391 = vmul.f32 %v1345, %v1383
    %v1392 = vmul.f32 %v1347, %v1384
    %v1393 = vmul.f32 %v1349, %v1385
    %v1394 = vmul.f32 %v1351, %v1386
    %v1395 = vmul.f32 %v1353, %v1387
    %v1396 = vmul.f32 %v1355, %v1388
    %v1397 = vmul.f32 %v1357, %v1389
    %1398 = vrot.lane.b32.xlu0 %v1067, 64
    %v1399 = vpop.permute.xlu0 %1398
    %v1402 = vsel %vm227, %v1390, 0
    %1404 = vmatpush.msra.mxu0 0.0
    %1405 = vmatpush.msra.mxu0 0.0
    %1406 = vmatpush.msra.mxu0 0.0
    %1407 = vmatpush.msra.mxu0 0.0
    %1408 = vmatpush.msra.mxu0 0.0
    %1409 = vmatpush.msra.mxu0 0.0
    %1410 = vmatpush.msra.mxu0 0.0
    %1411 = vmatpush.msra.mxu0 0.0
    %1412 = vmatpush.msra.mxu0 0.0
    %1413 = vmatpush.msra.mxu0 0.0
    %1414 = vmatpush.msra.mxu0 0.0
    %1415 = vmatpush.msra.mxu0 0.0
    %1416 = vmatpush.msra.mxu0 0.0
    %1417 = vmatpush.msra.mxu0 0.0
    %1418 = vmatpush.msra.mxu0 0.0
    %1419 = vmatpush.msra.mxu0 %v1399
    %1420 = vmatmul.f32.gmra.mxu0 %v1402
    %v1421 = vpop.f32.mrf.mxu0
    %v1422 = vadd.f32 0.0, %v1421
    %1423 = vdwg.mxu0
    %1424 = vrot.lane.b32.xlu0 %v1070, 64
    %v1425 = vpop.permute.xlu0 %1424
    %v1428 = vsel %vm227, %v1391, 0
    %1430 = vmatpush.msra.mxu0 0.0
    %1431 = vmatpush.msra.mxu0 0.0
    %1432 = vmatpush.msra.mxu0 0.0
    %1433 = vmatpush.msra.mxu0 0.0
    %1434 = vmatpush.msra.mxu0 0.0
    %1435 = vmatpush.msra.mxu0 0.0
    %1436 = vmatpush.msra.mxu0 0.0
    %1437 = vmatpush.msra.mxu0 0.0
    %1438 = vmatpush.msra.mxu0 0.0
    %1439 = vmatpush.msra.mxu0 0.0
    %1440 = vmatpush.msra.mxu0 0.0
    %1441 = vmatpush.msra.mxu0 0.0
    %1442 = vmatpush.msra.mxu0 0.0
    %1443 = vmatpush.msra.mxu0 0.0
    %1444 = vmatpush.msra.mxu0 0.0
    %1445 = vmatpush.msra.mxu0 %v1425
    %1446 = vmatmul.f32.gmra.mxu0 %v1428
    %v1447 = vpop.f32.mrf.mxu0
    %v1448 = vadd.f32 0.0, %v1447
    %1449 = vdwg.mxu0
    %1450 = vrot.lane.b32.xlu0 %v1075, 64
    %v1451 = vpop.permute.xlu0 %1450
    %v1454 = vsel %vm227, %v1392, 0
    %1456 = vmatpush.msra.mxu0 0.0
    %1457 = vmatpush.msra.mxu0 0.0
    %1458 = vmatpush.msra.mxu0 0.0
    %1459 = vmatpush.msra.mxu0 0.0
    %1460 = vmatpush.msra.mxu0 0.0
    %1461 = vmatpush.msra.mxu0 0.0
    %1462 = vmatpush.msra.mxu0 0.0
    %1463 = vmatpush.msra.mxu0 0.0
    %1464 = vmatpush.msra.mxu0 0.0
    %1465 = vmatpush.msra.mxu0 0.0
    %1466 = vmatpush.msra.mxu0 0.0
    %1467 = vmatpush.msra.mxu0 0.0
    %1468 = vmatpush.msra.mxu0 0.0
    %1469 = vmatpush.msra.mxu0 0.0
    %1470 = vmatpush.msra.mxu0 0.0
    %1471 = vmatpush.msra.mxu0 %v1451
    %1472 = vmatmul.f32.gmra.mxu0 %v1454
    %v1473 = vpop.f32.mrf.mxu0
    %v1474 = vadd.f32 0.0, %v1473
    %1475 = vdwg.mxu0
    %1476 = vrot.lane.b32.xlu0 %v1077, 64
    %v1477 = vpop.permute.xlu0 %1476
    %v1480 = vsel %vm227, %v1393, 0
    %1482 = vmatpush.msra.mxu0 0.0
    %1483 = vmatpush.msra.mxu0 0.0
    %1484 = vmatpush.msra.mxu0 0.0
    %1485 = vmatpush.msra.mxu0 0.0
    %1486 = vmatpush.msra.mxu0 0.0
    %1487 = vmatpush.msra.mxu0 0.0
    %1488 = vmatpush.msra.mxu0 0.0
    %1489 = vmatpush.msra.mxu0 0.0
    %1490 = vmatpush.msra.mxu0 0.0
    %1491 = vmatpush.msra.mxu0 0.0
    %1492 = vmatpush.msra.mxu0 0.0
    %1493 = vmatpush.msra.mxu0 0.0
    %1494 = vmatpush.msra.mxu0 0.0
    %1495 = vmatpush.msra.mxu0 0.0
    %1496 = vmatpush.msra.mxu0 0.0
    %1497 = vmatpush.msra.mxu0 %v1477
    %1498 = vmatmul.f32.gmra.mxu0 %v1480
    %v1499 = vpop.f32.mrf.mxu0
    %v1500 = vadd.f32 0.0, %v1499
    %1501 = vdwg.mxu0
    %1502 = vrot.lane.b32.xlu0 %v1079, 64
    %v1503 = vpop.permute.xlu0 %1502
    %v1506 = vsel %vm227, %v1394, 0
    %1508 = vmatpush.msra.mxu0 0.0
    %1509 = vmatpush.msra.mxu0 0.0
    %1510 = vmatpush.msra.mxu0 0.0
    %1511 = vmatpush.msra.mxu0 0.0
    %1512 = vmatpush.msra.mxu0 0.0
    %1513 = vmatpush.msra.mxu0 0.0
    %1514 = vmatpush.msra.mxu0 0.0
    %1515 = vmatpush.msra.mxu0 0.0
    %1516 = vmatpush.msra.mxu0 0.0
    %1517 = vmatpush.msra.mxu0 0.0
    %1518 = vmatpush.msra.mxu0 0.0
    %1519 = vmatpush.msra.mxu0 0.0
    %1520 = vmatpush.msra.mxu0 0.0
    %1521 = vmatpush.msra.mxu0 0.0
    %1522 = vmatpush.msra.mxu0 0.0
    %1523 = vmatpush.msra.mxu0 %v1503
    %1524 = vmatmul.f32.gmra.mxu0 %v1506
    %v1525 = vpop.f32.mrf.mxu0
    %v1526 = vadd.f32 0.0, %v1525
    %1527 = vdwg.mxu0
    %1528 = vrot.lane.b32.xlu0 %v1081, 64
    %v1529 = vpop.permute.xlu0 %1528
    %v1532 = vsel %vm227, %v1395, 0
    %1534 = vmatpush.msra.mxu0 0.0
    %1535 = vmatpush.msra.mxu0 0.0
    %1536 = vmatpush.msra.mxu0 0.0
    %1537 = vmatpush.msra.mxu0 0.0
    %1538 = vmatpush.msra.mxu0 0.0
    %1539 = vmatpush.msra.mxu0 0.0
    %1540 = vmatpush.msra.mxu0 0.0
    %1541 = vmatpush.msra.mxu0 0.0
    %1542 = vmatpush.msra.mxu0 0.0
    %1543 = vmatpush.msra.mxu0 0.0
    %1544 = vmatpush.msra.mxu0 0.0
    %1545 = vmatpush.msra.mxu0 0.0
    %1546 = vmatpush.msra.mxu0 0.0
    %1547 = vmatpush.msra.mxu0 0.0
    %1548 = vmatpush.msra.mxu0 0.0
    %1549 = vmatpush.msra.mxu0 %v1529
    %1550 = vmatmul.f32.gmra.mxu0 %v1532
    %v1551 = vpop.f32.mrf.mxu0
    %v1552 = vadd.f32 0.0, %v1551
    %1553 = vdwg.mxu0
    %1554 = vrot.lane.b32.xlu0 %v1083, 64
    %v1555 = vpop.permute.xlu0 %1554
    %v1558 = vsel %vm227, %v1396, 0
    %1560 = vmatpush.msra.mxu0 0.0
    %1561 = vmatpush.msra.mxu0 0.0
    %1562 = vmatpush.msra.mxu0 0.0
    %1563 = vmatpush.msra.mxu0 0.0
    %1564 = vmatpush.msra.mxu0 0.0
    %1565 = vmatpush.msra.mxu0 0.0
    %1566 = vmatpush.msra.mxu0 0.0
    %1567 = vmatpush.msra.mxu0 0.0
    %1568 = vmatpush.msra.mxu0 0.0
    %1569 = vmatpush.msra.mxu0 0.0
    %1570 = vmatpush.msra.mxu0 0.0
    %1571 = vmatpush.msra.mxu0 0.0
    %1572 = vmatpush.msra.mxu0 0.0
    %1573 = vmatpush.msra.mxu0 0.0
    %1574 = vmatpush.msra.mxu0 0.0
    %1575 = vmatpush.msra.mxu0 %v1555
    %1576 = vmatmul.f32.gmra.mxu0 %v1558
    %v1577 = vpop.f32.mrf.mxu0
    %v1578 = vadd.f32 0.0, %v1577
    %1579 = vdwg.mxu0
    %1580 = vrot.lane.b32.xlu0 %v1085, 64
    %v1581 = vpop.permute.xlu0 %1580
    %v1584 = vsel %vm227, %v1397, 0
    %1586 = vmatpush.msra.mxu0 0.0
    %1587 = vmatpush.msra.mxu0 0.0
    %1588 = vmatpush.msra.mxu0 0.0
    %1589 = vmatpush.msra.mxu0 0.0
    %1590 = vmatpush.msra.mxu0 0.0
    %1591 = vmatpush.msra.mxu0 0.0
    %1592 = vmatpush.msra.mxu0 0.0
    %1593 = vmatpush.msra.mxu0 0.0
    %1594 = vmatpush.msra.mxu0 0.0
    %1595 = vmatpush.msra.mxu0 0.0
    %1596 = vmatpush.msra.mxu0 0.0
    %1597 = vmatpush.msra.mxu0 0.0
    %1598 = vmatpush.msra.mxu0 0.0
    %1599 = vmatpush.msra.mxu0 0.0
    %1600 = vmatpush.msra.mxu0 0.0
    %1601 = vmatpush.msra.mxu0 %v1581
    %1602 = vmatmul.f32.gmra.mxu0 %v1584
    %v1603 = vpop.f32.mrf.mxu0
    %v1604 = vadd.f32 0.0, %v1603
    %1605 = vdwg.mxu0
    %1608 = vrot.lane.b32.xlu0 %v1474, 8
    %v1609 = vpop.permute.xlu0 %1608
    %1610 = vrot.lane.b32.xlu0 %v1500, 8
    %v1611 = vpop.permute.xlu0 %1610
    %1616 = vrot.lane.b32.xlu0 %v1526, 16
    %v1617 = vpop.permute.xlu0 %1616
    %1618 = vrot.lane.b32.xlu0 %v1552, 16
    %v1619 = vpop.permute.xlu0 %1618
    %1624 = vrot.lane.b32.xlu0 %v1578, 24
    %v1625 = vpop.permute.xlu0 %1624
    %1626 = vrot.lane.b32.xlu0 %v1604, 24
    %v1627 = vpop.permute.xlu0 %1626
    %v1630 = vsel %vm227, %v1422, %v1609
    %v1631 = vsel %vm227, %v1448, %v1611
    %v1632 = vsel %vm788, %v1630, %v1617
    %v1633 = vsel %vm788, %v1631, %v1619
    %v1634 = vsel %vm791, %v1632, %v1625
    %v1635 = vsel %vm791, %v1633, %v1627
    %v1636 = vld [vmem:[#allocation2 + $0x168] sm:$0xff]
    %v1637 = vld [vmem:[#allocation2 + $0x170] sm:$0xff]
    %v1638 = vld [vmem:[#allocation2 + $0x178] sm:$0xff]
    %v1639 = vld [vmem:[#allocation2 + $0x180] sm:$0xff]
    %v1640 = vld [vmem:[#allocation2 + $0x188] sm:$0x1]
    %v1641 = vperm.slane %v1640, 0
    %v1643 = vsel %vm89, %v1634, 0
    %v1646 = vsel %vm89, %v1635, 0
    %1648 = vmatpush.msra.mxu0 0.0
    %1649 = vmatpush.msra.mxu0 0.0
    %1650 = vmatpush.msra.mxu0 0.0
    %1651 = vmatpush.msra.mxu0 0.0
    %1652 = vmatpush.msra.mxu0 0.0
    %1653 = vmatpush.msra.mxu0 0.0
    %1654 = vmatpush.msra.mxu0 0.0
    %1655 = vmatpush.msra.mxu0 0.0
    %1656 = vmatpush.msra.mxu0 0.0
    %1657 = vmatpush.msra.mxu0 0.0
    %1658 = vmatpush.msra.mxu0 0.0
    %1659 = vmatpush.msra.mxu0 0.0
    %1660 = vmatpush.msra.mxu0 %v1639
    %1661 = vmatpush.msra.mxu0 %v1638
    %1662 = vmatpush.msra.mxu0 %v1637
    %1663 = vmatpush.msra.mxu0 %v1636
    %1664 = vmatmul.f32.gmra.mxu0 %v1643
    %v1665 = vpop.f32.mrf.mxu0
    %v1666 = vadd.f32 %v1641, %v1665
    %1667 = vmatmul.f32.gmra.mxu0 %v1646
    %v1668 = vpop.f32.mrf.mxu0
    %v1669 = vadd.f32 %v1641, %v1668
    %1670 = vdwg.mxu0
    %v1671 = vadd.f32 %v1666, %v1035
    %v1672 = vadd.f32 %v1669, %v1036
    %v1673 = vld [vmem:[#allocation2 + $0x190] sm:$0x1]
    %v1674 = vld [vmem:[#allocation2 + $0x198] sm:$0x1]
    %v1675 = vsel %vm89, %v1671, 0.0
    %1676 = vadd.xlane.f32.xlu0 %v1675
    %v1677 = vpop.xlane.xlu0 %1676
    %v1678 = vsel %vm89, %v1672, 0.0
    %1679 = vadd.xlane.f32.xlu0 %v1678
    %v1680 = vpop.xlane.xlu0 %1679
    %v1681 = vmul.f32 %v1677, %v102
    %v1682 = vmul.f32 %v1680, %v102
    %v1683 = vmul.f32 %v1671, %v1671
    %v1684 = vmul.f32 %v1672, %v1672
    %v1685 = vsel %vm89, %v1683, 0.0
    %1686 = vadd.xlane.f32.xlu0 %v1685
    %v1687 = vpop.xlane.xlu0 %1686
    %v1688 = vsel %vm89, %v1684, 0.0
    %1689 = vadd.xlane.f32.xlu0 %v1688
    %v1690 = vpop.xlane.xlu0 %1689
    %v1691 = vmul.f32 %v1687, %v102
    %v1692 = vmul.f32 %v1690, %v102
    %v1693 = vmul.f32 %v1681, %v1681
    %v1694 = vmul.f32 %v1682, %v1682
    %v1695 = vsub.f32 %v1691, %v1693
    %v1696 = vsub.f32 %v1692, %v1694
    %v1697 = vsub.f32 %v1671, %v1681
    %v1698 = vsub.f32 %v1672, %v1682
    %v1699 = vadd.f32 %v1695, 1e-12
    %v1700 = vadd.f32 %v1696, 1e-12
    %v1701 = vrsqrt.pop %v1699
    %v1702 = vmul.f32 %v1701, %v1699
    %v1703 = vmul.f32 %v1702, %v1701
    %v1704 = vmul.f32 0.5, %v1703
    %v1705 = vsub.f32 1.5, %v1704
    %v1706 = vmul.f32 %v1701, %v1705
    %vm1707 = vweird.f32 %v1699
    %vm1708 = vweird.f32 %v1701
    %vm1709 = vmor %vm1707, %vm1708
    %v1710 = vsel %vm1709, %v1701, %v1706
    %v1711 = vrsqrt.pop %v1700
    %v1712 = vmul.f32 %v1711, %v1700
    %v1713 = vmul.f32 %v1712, %v1711
    %v1714 = vmul.f32 0.5, %v1713
    %v1715 = vsub.f32 1.5, %v1714
    %v1716 = vmul.f32 %v1711, %v1715
    %vm1717 = vweird.f32 %v1700
    %vm1718 = vweird.f32 %v1711
    %vm1719 = vmor %vm1717, %vm1718
    %v1720 = vsel %vm1719, %v1711, %v1716
    %v1721 = vmul.f32 %v1697, %v1710
    %v1722 = vmul.f32 %v1698, %v1720
    %v1723 = vperm.slane %v1673, 0
    %v1724 = vmul.f32 %v1721, %v1723
    %v1725 = vmul.f32 %v1722, %v1723
    %v1726 = vperm.slane %v1674, 0
    %v1727 = vadd.f32 %v1724, %v1726
    %v1728 = vadd.f32 %v1725, %v1726
    %v1729 = vld [vmem:[#allocation2 + $0x1a0] sm:$0xff]
    %v1730 = vld [vmem:[#allocation2 + $0x1a8] sm:$0xff]
    %v1731 = vld [vmem:[#allocation2 + $0x1b0] sm:$0xff]
    %v1732 = vld [vmem:[#allocation2 + $0x1b8] sm:$0xff]
    %v1733 = vld [vmem:[#allocation2 + $0x1c0] sm:$0x1]
    %v1734 = vperm.slane %v1733, 0
    %v1736 = vsel %vm89, %v1727, 0
    %v1739 = vsel %vm89, %v1728, 0
    %1741 = vmatpush.msra.mxu0 0.0
    %1742 = vmatpush.msra.mxu0 0.0
    %1743 = vmatpush.msra.mxu0 0.0
    %1744 = vmatpush.msra.mxu0 0.0
    %1745 = vmatpush.msra.mxu0 0.0
    %1746 = vmatpush.msra.mxu0 0.0
    %1747 = vmatpush.msra.mxu0 0.0
    %1748 = vmatpush.msra.mxu0 0.0
    %1749 = vmatpush.msra.mxu0 0.0
    %1750 = vmatpush.msra.mxu0 0.0
    %1751 = vmatpush.msra.mxu0 0.0
    %1752 = vmatpush.msra.mxu0 0.0
    %1753 = vmatpush.msra.mxu0 %v1732
    %1754 = vmatpush.msra.mxu0 %v1731
    %1755 = vmatpush.msra.mxu0 %v1730
    %1756 = vmatpush.msra.mxu0 %v1729
    %1757 = vmatmul.f32.gmra.mxu0 %v1736
    %v1758 = vpop.f32.mrf.mxu0
    %v1759 = vadd.f32 %v1734, %v1758
    %1760 = vmatmul.f32.gmra.mxu0 %v1739
    %v1761 = vpop.f32.mrf.mxu0
    %v1762 = vadd.f32 %v1734, %v1761
    %1763 = vdwg.mxu0
    %v1764 = vmul.f32 %v1759, 0.5
    %v1765 = vmul.f32 %v1762, 0.5
    %v1766 = vmul.f32 %v1759, 0.044715
    %v1767 = vmul.f32 %v1762, 0.044715
    %v1768 = vmul.f32 %v1766, %v1759
    %v1769 = vmul.f32 %v1767, %v1762
    %v1770 = vmul.f32 %v1768, %v1759
    %v1771 = vmul.f32 %v1769, %v1762
    %v1772 = vadd.f32 %v1759, %v1770
    %v1773 = vadd.f32 %v1762, %v1771
    %v1774 = vmul.f32 %v1772, 0.7978846
    %v1775 = vmul.f32 %v1773, 0.7978846
    %v1776 = vtanh.pop %v1774
    %v1777 = vtanh.pop %v1775
    %v1778 = vadd.f32 %v1776, 1.0
    %v1779 = vadd.f32 %v1777, 1.0
    %v1780 = vmul.f32 %v1764, %v1778
    %v1781 = vmul.f32 %v1765, %v1779
    %v1782 = vld [vmem:[#allocation2 + $0x1c8] sm:$0xff]
    %v1783 = vld [vmem:[#allocation2 + $0x1d0] sm:$0xff]
    %v1784 = vld [vmem:[#allocation2 + $0x1d8] sm:$0xff]
    %v1785 = vld [vmem:[#allocation2 + $0x1e0] sm:$0xff]
    %v1786 = vld [vmem:[#allocation2 + $0x1e8] sm:$0xff]
    %v1787 = vld [vmem:[#allocation2 + $0x1f0] sm:$0xff]
    %v1788 = vld [vmem:[#allocation2 + $0x1f8] sm:$0xff]
    %v1789 = vld [vmem:[#allocation2 + $0x200] sm:$0xff]
    %v1790 = vld [vmem:[#allocation2 + $0x208] sm:$0x1]
    %v1791 = vperm.slane %v1790, 0
    %v1793 = vsel %vm57, %v1780, 0
    %v1796 = vsel %vm57, %v1781, 0
    %1798 = vmatpush.msra.mxu0 0.0
    %1799 = vmatpush.msra.mxu0 0.0
    %1800 = vmatpush.msra.mxu0 0.0
    %1801 = vmatpush.msra.mxu0 0.0
    %1802 = vmatpush.msra.mxu0 0.0
    %1803 = vmatpush.msra.mxu0 0.0
    %1804 = vmatpush.msra.mxu0 0.0
    %1805 = vmatpush.msra.mxu0 0.0
    %1806 = vmatpush.msra.mxu0 %v1789
    %1807 = vmatpush.msra.mxu0 %v1788
    %1808 = vmatpush.msra.mxu0 %v1787
    %1809 = vmatpush.msra.mxu0 %v1786
    %1810 = vmatpush.msra.mxu0 %v1785
    %1811 = vmatpush.msra.mxu0 %v1784
    %1812 = vmatpush.msra.mxu0 %v1783
    %1813 = vmatpush.msra.mxu0 %v1782
    %1814 = vmatmul.f32.gmra.mxu0 %v1793
    %v1815 = vpop.f32.mrf.mxu0
    %v1816 = vadd.f32 %v1791, %v1815
    %1817 = vmatmul.f32.gmra.mxu0 %v1796
    %v1818 = vpop.f32.mrf.mxu0
    %v1819 = vadd.f32 %v1791, %v1818
    %1820 = vdwg.mxu0
    %v1821 = vadd.f32 %v1816, %v1727
    %v1822 = vadd.f32 %v1819, %v1728
    %v1823 = vld [vmem:[#allocation2 + $0x210] sm:$0x1]
    %v1824 = vld [vmem:[#allocation2 + $0x218] sm:$0x1]
    %v1825 = vsel %vm89, %v1821, 0.0
    %1826 = vadd.xlane.f32.xlu0 %v1825
    %v1827 = vpop.xlane.xlu0 %1826
    %v1828 = vsel %vm89, %v1822, 0.0
    %1829 = vadd.xlane.f32.xlu0 %v1828
    %v1830 = vpop.xlane.xlu0 %1829
    %v1831 = vmul.f32 %v1827, %v102
    %v1832 = vmul.f32 %v1830, %v102
    %v1833 = vmul.f32 %v1821, %v1821
    %v1834 = vmul.f32 %v1822, %v1822
    %v1835 = vsel %vm89, %v1833, 0.0
    %1836 = vadd.xlane.f32.xlu0 %v1835
    %v1837 = vpop.xlane.xlu0 %1836
    %v1838 = vsel %vm89, %v1834, 0.0
    %1839 = vadd.xlane.f32.xlu0 %v1838
    %v1840 = vpop.xlane.xlu0 %1839
    %v1841 = vmul.f32 %v1837, %v102
    %v1842 = vmul.f32 %v1840, %v102
    %v1843 = vmul.f32 %v1831, %v1831
    %v1844 = vmul.f32 %v1832, %v1832
    %v1845 = vsub.f32 %v1841, %v1843
    %v1846 = vsub.f32 %v1842, %v1844
    %v1847 = vsub.f32 %v1821, %v1831
    %v1848 = vsub.f32 %v1822, %v1832
    %v1849 = vadd.f32 %v1845, 1e-12
    %v1850 = vadd.f32 %v1846, 1e-12
    %v1851 = vrsqrt.pop %v1849
    %v1852 = vmul.f32 %v1851, %v1849
    %v1853 = vmul.f32 %v1852, %v1851
    %v1854 = vmul.f32 0.5, %v1853
    %v1855 = vsub.f32 1.5, %v1854
    %v1856 = vmul.f32 %v1851, %v1855
    %vm1857 = vweird.f32 %v1849
    %vm1858 = vweird.f32 %v1851
    %vm1859 = vmor %vm1857, %vm1858
    %v1860 = vsel %vm1859, %v1851, %v1856
    %v1861 = vrsqrt.pop %v1850
    %v1862 = vmul.f32 %v1861, %v1850
    %v1863 = vmul.f32 %v1862, %v1861
    %v1864 = vmul.f32 0.5, %v1863
    %v1865 = vsub.f32 1.5, %v1864
    %v1866 = vmul.f32 %v1861, %v1865
    %vm1867 = vweird.f32 %v1850
    %vm1868 = vweird.f32 %v1861
    %vm1869 = vmor %vm1867, %vm1868
    %v1870 = vsel %vm1869, %v1861, %v1866
    %v1871 = vmul.f32 %v1847, %v1860
    %v1872 = vmul.f32 %v1848, %v1870
    %v1873 = vperm.slane %v1823, 0
    %v1874 = vmul.f32 %v1871, %v1873
    %v1875 = vmul.f32 %v1872, %v1873
    %v1876 = vperm.slane %v1824, 0
    %v1877 = vadd.f32 %v1874, %v1876
    %v1878 = vadd.f32 %v1875, %v1876
    %v1879 = vld [vmem:[#allocation2 + $0x270] sm:$0x3]
    %v1881 = vsel %vm788, %v1879, 0
    %1883 = vmatpush.msra.mxu0 0.0
    %1884 = vmatpush.msra.mxu0 0.0
    %1885 = vmatpush.msra.mxu0 0.0
    %1886 = vmatpush.msra.mxu0 0.0
    %1887 = vmatpush.msra.mxu0 0.0
    %1888 = vmatpush.msra.mxu0 0.0
    %1889 = vmatpush.msra.mxu0 0.0
    %1890 = vmatpush.msra.mxu0 0.0
    %1891 = vmatpush.msra.mxu0 0.0
    %1892 = vmatpush.msra.mxu0 0.0
    %1893 = vmatpush.msra.mxu0 0.0
    %1894 = vmatpush.msra.mxu0 0.0
    %1895 = vmatpush.msra.mxu0 0.0
    %1896 = vmatpush.msra.mxu0 0.0
    %1897 = vmatpush.msra.mxu0 %v1878
    %1898 = vmatpush.msra.mxu0 %v1877
    %1899 = vmatmul.f32.gmra.mxu0 %v1881
    %v1900 = vpop.f32.mrf.mxu0
    %v1901 = vadd.f32 0.0, %v1900
    %1902 = vdwg.mxu0
    %v1903 = vld [vmem:[#allocation2 + $0x220] sm:$0xff]
    %v1904 = vld [vmem:[#allocation2 + $0x228] sm:$0xff]
    %v1905 = vld [vmem:[#allocation2 + $0x230] sm:$0xff]
    %v1906 = vld [vmem:[#allocation2 + $0x238] sm:$0xff]
    %v1907 = vld [vmem:[#allocation2 + $0x240] sm:$0x1]
    %v1908 = vperm.slane %v1907, 0
    %v1910 = vsel %vm89, %v1901, 0
    %1912 = vmatpush.msra.mxu0 0.0
    %1913 = vmatpush.msra.mxu0 0.0
    %1914 = vmatpush.msra.mxu0 0.0
    %1915 = vmatpush.msra.mxu0 0.0
    %1916 = vmatpush.msra.mxu0 0.0
    %1917 = vmatpush.msra.mxu0 0.0
    %1918 = vmatpush.msra.mxu0 0.0
    %1919 = vmatpush.msra.mxu0 0.0
    %1920 = vmatpush.msra.mxu0 0.0
    %1921 = vmatpush.msra.mxu0 0.0
    %1922 = vmatpush.msra.mxu0 0.0
    %1923 = vmatpush.msra.mxu0 0.0
    %1924 = vmatpush.msra.mxu0 %v1906
    %1925 = vmatpush.msra.mxu0 %v1905
    %1926 = vmatpush.msra.mxu0 %v1904
    %1927 = vmatpush.msra.mxu0 %v1903
    %1928 = vmatmul.f32.gmra.mxu0 %v1910
    %v1929 = vpop.f32.mrf.mxu0
    %v1930 = vadd.f32 %v1908, %v1929
    %1931 = vdwg.mxu0
    %v1932 = vtanh.pop %v1930
    %v1933 = vld [vmem:[#allocation2 + $0x248] sm:$0xff]
    %v1934 = vld [vmem:[#allocation2 + $0x250] sm:$0xff]
    %v1935 = vld [vmem:[#allocation2 + $0x258] sm:$0xff]
    %v1936 = vld [vmem:[#allocation2 + $0x260] sm:$0xff]
    %v1937 = vld [vmem:[#allocation2 + $0x268] sm:$0x1]
    %v1938 = vperm.slane %v1937, 0
    %v1940 = vsel %vm89, %v1932, 0
    %1942 = vmatpush.msra.mxu0 0.0
    %1943 = vmatpush.msra.mxu0 0.0
    %1944 = vmatpush.msra.mxu0 0.0
    %1945 = vmatpush.msra.mxu0 0.0
    %1946 = vmatpush.msra.mxu0 0.0
    %1947 = vmatpush.msra.mxu0 0.0
    %1948 = vmatpush.msra.mxu0 0.0
    %1949 = vmatpush.msra.mxu0 0.0
    %1950 = vmatpush.msra.mxu0 0.0
    %1951 = vmatpush.msra.mxu0 0.0
    %1952 = vmatpush.msra.mxu0 0.0
    %1953 = vmatpush.msra.mxu0 0.0
    %1954 = vmatpush.msra.mxu0 %v1936
    %1955 = vmatpush.msra.mxu0 %v1935
    %1956 = vmatpush.msra.mxu0 %v1934
    %1957 = vmatpush.msra.mxu0 %v1933
    %1958 = vmatmul.f32.gmra.mxu0 %v1940
    %v1959 = vpop.f32.mrf.mxu0
    %v1960 = vadd.f32 %v1938, %v1959
    %1961 = vdwg.mxu0
    %1962 = vst [vmem:[#allocation5] sm:$0x3] %v1960
    // Predicated region
    $region18: #{fwd.1} parent=1 // pred_check
      _
    $region19: #{fwd.1} parent=1 // pred_check_branch
      %1964 = sbr.rel (0) target = $region21
    $region20: #{fwd.1} parent=1 // pred_region
      %1966 = vsyncadd [#allocation4], 0
      %s1968 = sshll.u32 [#allocation5], 4
      %s1969 = int_to_ptr.vmem [resolvable:$true] %s1968
      %s1970 = sshll.u32 %s3, 4
      %s1971 = int_to_ptr.hbm [resolvable:$true] %s1970
      %1973 = dma.vmem_to_hbm [thread:$0]  %s1969, 32, %s1971, [#allocation4]
    $region21: #{fwd.1} parent=1 // pred_fallthru
      _
    // Predicated region
    $region22: #{fwd.1} parent=1 // pred_check
      _
    $region23: #{fwd.1} parent=1 // pred_check_branch
      %1975 = sbr.rel (0) target = $region25
    $region24: #{fwd.1} parent=1 // pred_region
      %1977 = dma.done [#allocation4], 32
    $region25: #{fwd.1} parent=1 // pred_fallthru
      _
    %1978 = vsyncpa [#allocation3], 1
    %1979 = vsyncpa [#allocation4], 1

</llo_original>
